<compile_context>
chip_gen: v6e
topology: v6e:2x2x1
jax: 0.10.0
libtpu: 0.0.40
codegen_flags: <defaults>
</compile_context>

<pallas_src>
import jax
import jax.numpy as jnp
from jax.experimental import pallas as pl
from jax.experimental.pallas import tpu as pltpu

# ---- toy dims (lane-aligned, consistent with the module) ----
B = 2                  # batch
S = 128                # sequence length
H = 128                # hidden size
VOCAB = 512            # vocab_size (toy)
MAX_POS = 128          # max_position_embeddings (>= S)
TYPE_VOCAB = 2         # type_vocab_size
LN_EPS = 1e-12

N = B * S              # tokens with batch folded into rows

# TILE_N = 128 matches the v5e 128x128 MXU and gives exactly 2 "parallel" grid steps
# (one per v7x TensorCore) at the toy N = 256.  On v6e (256-wide MXU) or for larger
# N, raise to 256 and keep >= 4 steps per core so the BlockSpec pipeline overlaps.
TILE_N = 128


def bert_embeddings_kernel(ids_ref, pos_ref, whi_ref, wlo_ref, type_ref,
                           gamma_ref, beta_ref, out_ref):
    ids = ids_ref[...]                       # (TILE_N, 2) int32: [word_id, type_id]
    wid = ids[:, 0:1]
    tid = ids[:, 1:2]

    # One-hot word selector over the vocab only (no pos/type segments); a single
    # compare, cast straight to bf16 (exact for 0/1) -> 1/3 smaller than before.
    lane = jax.lax.broadcasted_iota(jnp.int32, (TILE_N, VOCAB), 1)
    hot = (lane == wid).astype(jnp.bfloat16)

    # Word-embedding gather as a bf16 MXU selection; the hi/lo table split keeps
    # ~f32 accuracy with two single-pass bf16 dots instead of multi-pass f32
    # emulation (f32 accumulation).
    emb = jnp.dot(hot, whi_ref[...], preferred_element_type=jnp.float32)
    emb = emb + jnp.dot(hot, wlo_ref[...], preferred_element_type=jnp.float32)

    # Position embeddings arrive as a contiguous (TILE_N, H) slice via BlockSpec.
    emb = emb + pos_ref[...]

    # token_type vocab is 2: one broadcast select replaces the old selector segment.
    tt = type_ref[...]                                     # (TYPE_VOCAB, H)
    emb = emb + jnp.where(tid > 0, tt[1:2, :], tt[0:1, :])

    # LayerNorm over the hidden (lane) axis in f32, reusing the centered tensor.
    mu = jnp.mean(emb, axis=-1, keepdims=True)
    xc = emb - mu
    var = jnp.mean(xc * xc, axis=-1, keepdims=True)
    y = xc * jax.lax.rsqrt(var + LN_EPS)
    y = y * gamma_ref[...] + beta_ref[...]

    # Dropout is identity in eval mode.
    out_ref[...] = y.astype(out_ref.dtype)


def prepare_embedding_tables(params):
    """One-time table preparation, hoisted out of the per-forward path."""
    w = params["word_emb"].astype(jnp.float32)
    w_hi = w.astype(jnp.bfloat16)
    w_lo = (w - w_hi.astype(jnp.float32)).astype(jnp.bfloat16)
    return {
        "word_hi": w_hi,                                      # (VOCAB, H) bf16
        "word_lo": w_lo,                                      # (VOCAB, H) bf16 residual
        "pos_emb": params["pos_emb"].astype(jnp.float32),     # (MAX_POS, H)
        "type_emb": params["type_emb"].astype(jnp.float32),   # (TYPE_VOCAB, H)
        "ln_w": params["ln_w"].reshape(1, H).astype(jnp.float32),
        "ln_b": params["ln_b"].reshape(1, H).astype(jnp.float32),
    }


def bert_embeddings(input_ids, token_type_ids, position_ids, tables):
    """input_ids: (B, S) int; token_type_ids/position_ids may be None (module defaults)."""
    b, s = input_ids.shape
    n = b * s
    if n % TILE_N != 0:
        raise ValueError(f"B*S={n} must be a multiple of TILE_N={TILE_N}; "
                         "trailing tokens would otherwise be dropped")
    if token_type_ids is None:
        token_type_ids = jnp.zeros((b, s), jnp.int32)

    # Pack word/type ids into one (N, 2) operand -> one id DMA per grid step.
    # NOTE: ids are not range-checked in-kernel (unlike nn.Embedding, which errors).
    ids = jnp.stack([input_ids.reshape(n).astype(jnp.int32),
                     token_type_ids.reshape(n).astype(jnp.int32)], axis=-1)

    if position_ids is None and s % TILE_N == 0:
        if s > tables["pos_emb"].shape[0]:
            raise ValueError("sequence length exceeds max_position_embeddings")
        # Default arange positions: each row tile maps to a contiguous slice of the
        # position table, so the kernel just adds it -- no gather, no selector.
        pos_input = tables["pos_emb"]
        blocks_per_seq = s // TILE_N
        pos_spec = pl.BlockSpec((TILE_N, H), lambda i: (i % blocks_per_seq, 0))
    else:
        if position_ids is None:
            position_ids = jnp.broadcast_to(
                jnp.arange(s, dtype=jnp.int32)[None, :], (b, s))
        pos_input = tables["pos_emb"][position_ids.reshape(n)]     # (N, H) slab
        pos_spec = pl.BlockSpec((TILE_N, H), lambda i: (i, 0))

    full = lambda shape: pl.BlockSpec(shape, lambda i: (0,) * len(shape))

    # TODO(synk): at production BERT sizes (vocab ~30k, H 768) the word table cannot
    # live in VMEM; switch to a scalar-prefetch-driven make_async_copy row gather from
    # an HBM-resident (memory_space=pl.ANY) table and keep only add+LayerNorm on VPU.
    out = pl.pallas_call(
        bert_embeddings_kernel,
        out_shape=jax.ShapeDtypeStruct((n, H), jnp.float32),
        grid_spec=pltpu.PrefetchScalarGridSpec(
            num_scalar_prefetch=0,
            grid=(n // TILE_N,),
            in_specs=[
                pl.BlockSpec((TILE_N, 2), lambda i: (i, 0)),   # packed word/type ids
                pos_spec,                                      # position rows
                full((VOCAB, H)),                              # word table, bf16 hi
                full((VOCAB, H)),                              # word table, bf16 lo
                full((TYPE_VOCAB, H)),                         # token-type rows
                full((1, H)),                                  # LayerNorm gamma
                full((1, H)),                                  # LayerNorm beta
            ],
            out_specs=pl.BlockSpec((TILE_N, H), lambda i: (i, 0)),
        ),
        compiler_params=pltpu.CompilerParams(
            dimension_semantics=("parallel",)),
    )(ids, pos_input, tables["word_hi"], tables["word_lo"],
      tables["type_emb"], tables["ln_w"], tables["ln_b"])
    return out.reshape(b, s, H)


def bert_embeddings_ref(input_ids, token_type_ids, position_ids, params):
    """Plain-JAX reference matching the PyTorch forward (eval mode)."""
    b, s = input_ids.shape
    if position_ids is None:
        position_ids = jnp.broadcast_to(jnp.arange(s, dtype=jnp.int32)[None, :], (b, s))
    if token_type_ids is None:
        token_type_ids = jnp.zeros((b, s), jnp.int32)
    e = (params["word_emb"][input_ids]
         + params["pos_emb"][position_ids]
         + params["type_emb"][token_type_ids])
    mu = jnp.mean(e, axis=-1, keepdims=True)
    var = jnp.mean(jnp.square(e - mu), axis=-1, keepdims=True)
    return (e - mu) * jax.lax.rsqrt(var + LN_EPS) * params["ln_w"] + params["ln_b"]


def make_params(key):
    k1, k2, k3, k4, k5 = jax.random.split(key, 5)
    word = jax.random.normal(k1, (VOCAB, H), jnp.float32) * 0.02
    word = word.at[0].set(0.0)   # padding_idx=0 row is zeros (as in nn.Embedding init)
    return {
        "word_emb": word,
        "pos_emb": jax.random.normal(k2, (MAX_POS, H), jnp.float32) * 0.02,
        "type_emb": jax.random.normal(k3, (TYPE_VOCAB, H), jnp.float32) * 0.02,
        "ln_w": 1.0 + 0.1 * jax.random.normal(k4, (H,), jnp.float32),
        "ln_b": 0.05 * jax.random.normal(k5, (H,), jnp.float32),
    }


if __name__ == "__main__":
    key = jax.random.PRNGKey(0)
    kp, kid = jax.random.split(key)

    params = make_params(kp)
    tables = prepare_embedding_tables(params)   # hoisted: done once, not per forward

    input_ids = jax.random.randint(kid, (B, S), 0, VOCAB, dtype=jnp.int32)
    # Segment-B mask on the second half of every sequence (BERT-style token types).
    token_type_ids = jnp.broadcast_to(
        (jnp.arange(S) >= S // 2).astype(jnp.int32)[None, :], (B, S))

    # TODO(synk): training-mode dropout (hidden_dropout_prob) not implemented; eval forward only.
    out = jax.block_until_ready(
        bert_embeddings(input_ids, token_type_ids, None, tables))
    ref = jax.block_until_ready(
        bert_embeddings_ref(input_ids, token_type_ids, None, params))

    assert out.shape == (B, S, H)
    assert jnp.allclose(out, ref, atol=1e-4, rtol=1e-4), (
        float(jnp.max(jnp.abs(out - ref))))

    print("KERNEL_OK")
</pallas_src>

<mosaic_0001>
module attributes {stable_mosaic.version = 11 : i64} {
  func.func @bert_embeddings_kernel(%arg0: i32, %arg1: memref<128x2xi32, #tpu.memory_space<vmem>>, %arg2: memref<128x128xf32, #tpu.memory_space<vmem>>, %arg3: memref<512x128xbf16, #tpu.memory_space<vmem>>, %arg4: memref<512x128xbf16, #tpu.memory_space<vmem>>, %arg5: memref<2x128xf32, #tpu.memory_space<vmem>>, %arg6: memref<1x128xf32, #tpu.memory_space<vmem>>, %arg7: memref<1x128xf32, #tpu.memory_space<vmem>>, %arg8: memref<128x128xf32, #tpu.memory_space<vmem>>) attributes {dimension_semantics = [#tpu.dimension_semantics<parallel>], iteration_bounds = array<i64: 2>, scalar_prefetch = 0 : i64, scratch_operands = 0 : i64, tpu.core_type = #tpu.core_type<tc>, window_params = [{transform_indices = @transform_0, window_bounds = array<i64: 128, 2>}, {transform_indices = @transform_1, window_bounds = array<i64: 128, 128>}, {pipeline_mode = #tpu.pipeline_mode<synchronous>, transform_indices = @transform_2, window_bounds = array<i64: 512, 128>}, {pipeline_mode = #tpu.pipeline_mode<synchronous>, transform_indices = @transform_3, window_bounds = array<i64: 512, 128>}, {pipeline_mode = #tpu.pipeline_mode<synchronous>, transform_indices = @transform_4, window_bounds = array<i64: 2, 128>}, {pipeline_mode = #tpu.pipeline_mode<synchronous>, transform_indices = @transform_5, window_bounds = array<i64: 1, 128>}, {pipeline_mode = #tpu.pipeline_mode<synchronous>, transform_indices = @transform_6, window_bounds = array<i64: 1, 128>}, {transform_indices = @transform_7, window_bounds = array<i64: 128, 128>}]} {
    %c0 = arith.constant 0 : index
    %c0_0 = arith.constant 0 : index
    %0 = vector.load %arg1[%c0, %c0_0] : memref<128x2xi32, #tpu.memory_space<vmem>>, vector<128x2xi32>
    %1 = vector.extract_strided_slice %0 {offsets = [0, 0], sizes = [128, 1], strides = [1, 1]} : vector<128x2xi32> to vector<128x1xi32>
    %2 = vector.extract_strided_slice %0 {offsets = [0, 1], sizes = [128, 1], strides = [1, 1]} : vector<128x2xi32> to vector<128x1xi32>
    %3 = tpu.iota {dimensions = array<i32: 1>} : vector<128x512xi32>
    %4 = vector.broadcast %1 : vector<128x1xi32> to vector<128x512xi32>
    %5 = arith.cmpi eq, %3, %4 : vector<128x512xi32>
    %6 = arith.extui %5 : vector<128x512xi1> to vector<128x512xi32>
    %7 = arith.sitofp %6 : vector<128x512xi32> to vector<128x512xf32>
    %8 = arith.truncf %7 : vector<128x512xf32> to vector<128x512xbf16>
    %c0_1 = arith.constant 0 : index
    %c0_2 = arith.constant 0 : index
    %9 = vector.load %arg3[%c0_1, %c0_2] : memref<512x128xbf16, #tpu.memory_space<vmem>>, vector<512x128xbf16>
    %cst = arith.constant dense<0.000000e+00> : vector<128x128xf32>
    %10 = tpu.matmul %8, %9, %cst {dimension_numbers = #tpu.dot_dimension_numbers<[1], [0], [0], [1], [0, 0, 1, 1], [], []>} : vector<128x512xbf16>, vector<512x128xbf16>, vector<128x128xf32> -> vector<128x128xf32>
    %c0_3 = arith.constant 0 : index
    %c0_4 = arith.constant 0 : index
    %11 = vector.load %arg4[%c0_3, %c0_4] : memref<512x128xbf16, #tpu.memory_space<vmem>>, vector<512x128xbf16>
    %cst_5 = arith.constant dense<0.000000e+00> : vector<128x128xf32>
    %12 = tpu.matmul %8, %11, %cst_5 {dimension_numbers = #tpu.dot_dimension_numbers<[1], [0], [0], [1], [0, 0, 1, 1], [], []>} : vector<128x512xbf16>, vector<512x128xbf16>, vector<128x128xf32> -> vector<128x128xf32>
    %13 = arith.addf %10, %12 : vector<128x128xf32>
    %c0_6 = arith.constant 0 : index
    %c0_7 = arith.constant 0 : index
    %14 = vector.load %arg2[%c0_6, %c0_7] : memref<128x128xf32, #tpu.memory_space<vmem>>, vector<128x128xf32>
    %15 = arith.addf %13, %14 : vector<128x128xf32>
    %c0_8 = arith.constant 0 : index
    %c0_9 = arith.constant 0 : index
    %16 = vector.load %arg5[%c0_8, %c0_9] : memref<2x128xf32, #tpu.memory_space<vmem>>, vector<2x128xf32>
    %c0_i32 = arith.constant 0 : i32
    %17 = vector.broadcast %c0_i32 : i32 to vector<128x1xi32>
    %18 = arith.cmpi sgt, %2, %17 : vector<128x1xi32>
    %19 = vector.extract_strided_slice %16 {offsets = [1, 0], sizes = [1, 128], strides = [1, 1]} : vector<2x128xf32> to vector<1x128xf32>
    %20 = vector.extract_strided_slice %16 {offsets = [0, 0], sizes = [1, 128], strides = [1, 1]} : vector<2x128xf32> to vector<1x128xf32>
    %21 = vector.shape_cast %18 : vector<128x1xi1> to vector<128x1xi1>
    %22 = vector.broadcast %21 : vector<128x1xi1> to vector<128x128xi1>
    %23 = vector.shape_cast %19 : vector<1x128xf32> to vector<1x128xf32>
    %24 = vector.broadcast %23 : vector<1x128xf32> to vector<128x128xf32>
    %25 = vector.shape_cast %20 : vector<1x128xf32> to vector<1x128xf32>
    %26 = vector.broadcast %25 : vector<1x128xf32> to vector<128x128xf32>
    %27 = arith.select %22, %24, %26 : vector<128x128xi1>, vector<128x128xf32>
    %28 = arith.addf %15, %27 : vector<128x128xf32>
    %cst_10 = arith.constant dense<0.000000e+00> : vector<128xf32>
    %29 = vector.multi_reduction <add>, %28, %cst_10 [1] : vector<128x128xf32> to vector<128xf32>
    %30 = vector.shape_cast %29 : vector<128xf32> to vector<128x1xf32>
    %cst_11 = arith.constant 1.280000e+02 : f32
    %31 = vector.broadcast %cst_11 : f32 to vector<128x1xf32>
    %32 = arith.divf %30, %31 : vector<128x1xf32>
    %33 = vector.broadcast %32 : vector<128x1xf32> to vector<128x128xf32>
    %34 = arith.subf %28, %33 : vector<128x128xf32>
    %35 = arith.mulf %34, %34 : vector<128x128xf32>
    %cst_12 = arith.constant dense<0.000000e+00> : vector<128xf32>
    %36 = vector.multi_reduction <add>, %35, %cst_12 [1] : vector<128x128xf32> to vector<128xf32>
    %37 = vector.shape_cast %36 : vector<128xf32> to vector<128x1xf32>
    %cst_13 = arith.constant 1.280000e+02 : f32
    %38 = vector.broadcast %cst_13 : f32 to vector<128x1xf32>
    %39 = arith.divf %37, %38 : vector<128x1xf32>
    %cst_14 = arith.constant 9.99999996E-13 : f32
    %40 = vector.broadcast %cst_14 : f32 to vector<128x1xf32>
    %41 = arith.addf %39, %40 : vector<128x1xf32>
    %42 = math.rsqrt %41 : vector<128x1xf32>
    %43 = vector.broadcast %42 : vector<128x1xf32> to vector<128x128xf32>
    %44 = arith.mulf %34, %43 : vector<128x128xf32>
    %c0_15 = arith.constant 0 : index
    %c0_16 = arith.constant 0 : index
    %45 = vector.load %arg6[%c0_15, %c0_16] : memref<1x128xf32, #tpu.memory_space<vmem>>, vector<1x128xf32>
    %46 = vector.broadcast %45 : vector<1x128xf32> to vector<128x128xf32>
    %47 = arith.mulf %44, %46 : vector<128x128xf32>
    %c0_17 = arith.constant 0 : index
    %c0_18 = arith.constant 0 : index
    %48 = vector.load %arg7[%c0_17, %c0_18] : memref<1x128xf32, #tpu.memory_space<vmem>>, vector<1x128xf32>
    %49 = vector.broadcast %48 : vector<1x128xf32> to vector<128x128xf32>
    %50 = arith.addf %47, %49 : vector<128x128xf32>
    %c0_19 = arith.constant 0 : index
    %c0_20 = arith.constant 0 : index
    %51 = vector.load %arg8[%c0_19, %c0_20] : memref<128x128xf32, #tpu.memory_space<vmem>>, vector<128x128xf32>
    tpu.vector_store %arg8[%c0_19, %c0_20], %50 {strides = array<i32>} : memref<128x128xf32, #tpu.memory_space<vmem>>, vector<128x128xf32>,
    return
  }
  func.func @transform_0(%arg0: i32) -> (i32, i32) {
    %c0_i32 = arith.constant 0 : i32
    %c0_i32_0 = arith.constant 0 : i32
    return %arg0, %c0_i32 : i32, i32
  }
  func.func @transform_1(%arg0: i32) -> (i32, i32) {
    %c1_i32 = arith.constant 1 : i32
    %c0_i32 = arith.constant 0 : i32
    %0 = arith.cmpi eq, %c1_i32, %c0_i32 : i32
    %c1_i32_0 = arith.constant 1 : i32
    %1 = arith.select %0, %c1_i32_0, %c1_i32 : i32
    %2 = arith.remsi %arg0, %1 : i32
    %c0_i32_1 = arith.constant 0 : i32
    %3 = arith.cmpi ne, %2, %c0_i32_1 : i32
    %c0_i32_2 = arith.constant 0 : i32
    %4 = arith.cmpi slt, %2, %c0_i32_2 : i32
    %c0_i32_3 = arith.constant 0 : i32
    %5 = arith.cmpi slt, %1, %c0_i32_3 : i32
    %6 = arith.xori %4, %5 : i1
    %7 = arith.andi %6, %3 : i1
    %8 = arith.addi %2, %1 : i32
    %9 = arith.select %7, %8, %2 : i32
    %c0_i32_4 = arith.constant 0 : i32
    %c0_i32_5 = arith.constant 0 : i32
    return %9, %c0_i32_4 : i32, i32
  }
  func.func @transform_2(%arg0: i32) -> (i32, i32) {
    %c0_i32 = arith.constant 0 : i32
    %c0_i32_0 = arith.constant 0 : i32
    %c0_i32_1 = arith.constant 0 : i32
    return %c0_i32, %c0_i32_0 : i32, i32
  }
  func.func @transform_3(%arg0: i32) -> (i32, i32) {
    %c0_i32 = arith.constant 0 : i32
    %c0_i32_0 = arith.constant 0 : i32
    %c0_i32_1 = arith.constant 0 : i32
    return %c0_i32, %c0_i32_0 : i32, i32
  }
  func.func @transform_4(%arg0: i32) -> (i32, i32) {
    %c0_i32 = arith.constant 0 : i32
    %c0_i32_0 = arith.constant 0 : i32
    %c0_i32_1 = arith.constant 0 : i32
    return %c0_i32, %c0_i32_0 : i32, i32
  }
  func.func @transform_5(%arg0: i32) -> (i32, i32) {
    %c0_i32 = arith.constant 0 : i32
    %c0_i32_0 = arith.constant 0 : i32
    %c0_i32_1 = arith.constant 0 : i32
    return %c0_i32, %c0_i32_0 : i32, i32
  }
  func.func @transform_6(%arg0: i32) -> (i32, i32) {
    %c0_i32 = arith.constant 0 : i32
    %c0_i32_0 = arith.constant 0 : i32
    %c0_i32_1 = arith.constant 0 : i32
    return %c0_i32, %c0_i32_0 : i32, i32
  }
  func.func @transform_7(%arg0: i32) -> (i32, i32) {
    %c0_i32 = arith.constant 0 : i32
    %c0_i32_0 = arith.constant 0 : i32
    return %arg0, %c0_i32 : i32, i32
  }
}

</mosaic_0001>

<llo_original>
// kernel: tpu_custom_call.1
$region0: #{tpu_custom_call.1}
  #allocation0 [shape = 'u32[]', space=smem, size = 0x4, offset = 0x4, fixed_abs, tag = 'smem constant byte address 0x4 - core index']
  #allocation1 [shape = 'u32[144,128]{1,0:T(1,128)}', space=vmem, size = 0x12000, scoped, tag = 'internal scratch']
  %s0 = inlined_call_operand.vmem [shape: s32[256,2], index: 0, kind: input, shape index: {}]
  %s1 = inlined_call_operand.hbm [shape: f32[128,128], index: 1, kind: input, shape index: {}]
  %s2 = inlined_call_operand.vmem [shape: bf16[512,128], index: 2, kind: input, shape index: {}]
  %s3 = inlined_call_operand.hbm [shape: bf16[512,128], index: 3, kind: input, shape index: {}]
  %s4 = inlined_call_operand.vmem [shape: f32[2,128], index: 4, kind: input, shape index: {}]
  %s5 = inlined_call_operand.vmem [shape: f32[1,128], index: 5, kind: input, shape index: {}]
  %s6 = inlined_call_operand.vmem [shape: f32[1,128], index: 6, kind: input, shape index: {}]
  %s7 = inlined_call_operand.hbm [shape: f32[256,128], index: 7, kind: output, shape index: {}]
  %s8 = sld [smem:[#allocation0]]
  $region69: #{tpu_custom_call.1} parent=0
    _
  %s10 = ssub.s32 1, %s8
  %s11 = scalar_select 0, %s10, %s8
  $region1: #{tpu_custom_call.1} parent=0
    #allocation2 [shape = 'u8[65536]{0}', space=vmem, size = 0x10000, scoped, tag = 'input window, operand 1, single buffered']
    #allocation3 [shape = 's32[2]{0}', space=sflag, size = 0x8, scoped, tag = 'scoped memory for tpu_custom_call.1']
    #allocation4 [shape = 's32[2]{0}', space=sflag, size = 0x8, scoped, tag = 'scoped memory for tpu_custom_call.1']
    #allocation5 [shape = 'u8[131072]{0}', space=vmem, size = 0x20000, scoped, tag = 'input window, operand 3, single buffered']
    #allocation6 [shape = 's32[1]{0}', space=sflag, size = 0x4, scoped, tag = 'scoped memory for tpu_custom_call.1']
    #allocation7 [shape = 'u8[131072]{0}', space=vmem, size = 0x20000, scoped, tag = 'output window, operand 0']
    %12 = vsyncpa [#allocation3], 0
    %13 = vsyncpa [#allocation6], 0
    %14 = vsyncpa [#allocation4], 0
    %s15 = scalar_lea.sflag [#allocation4], 1
    %16 = vsyncpa %s15, 0
    loop: start=0, step=1, limit=4
    $region2: #{tpu_custom_call.1} parent=1 // loop_pre_header
      _
    $region3: #{tpu_custom_call.1} parent=1 // loop_header
      %s18 = sphi 0, %s22
      %p19 = scmp.ge.s32.totalorder %s18, 4
      %s28 = sphi 0, %s30
      %s31 = sphi 0, %s28
      %s32 = sphi 0, %s31
      %s48 = sphi 0, %s32
      %s52 = sphi 0, %s52
      %s54 = sphi 0, %s52
      %s55 = sphi 0, %s54
      %s69 = sphi 0, %s55
      %s73 = sphi 0, %s73
      %s75 = sphi 0, %s73
      %s76 = sphi 0, %s75
      %s90 = sphi 0, %s76
      %s94 = sphi 0, %s94
      %s96 = sphi 0, %s94
      %s97 = sphi 0, %s96
      %s111 = sphi 0, %s97
      %s115 = sphi 0, %s115
      %s117 = sphi 0, %s115
      %s118 = sphi 0, %s117
      %s132 = sphi 0, %s118
      %s136 = sphi 0, %s136
      %s138 = sphi 0, %s136
      %s139 = sphi 0, %s138
      %s153 = sphi 0, %s139
      %s157 = sphi 0, %s157
      %s159 = sphi 0, %s157
      %s160 = sphi 0, %s159
      %s174 = sphi 0, %s160
      %s180 = sphi 0, %s182
      %s183 = sphi 0, %s180
      %s184 = sphi 0, %s183
      %s200 = sphi 0, %s184
    $region4: #{tpu_custom_call.1} parent=1 // loop_header_branch
      %21 = sbr.rel (%p19) target = $region8
    $region5: #{tpu_custom_call.1} parent=1 // loop_body
      %s23 = ssub.s32 %s18, 1
      %s24 = ssub.s32 %s18, 2
      %s25 = sadd.s32 %s18, 1
      %s26 = ssub.s32 %s18, %s25
      %p27 = scmp.eq.s32.totalorder %s26, 0
      %s29 = sadd.s32 %s28, 1
      %s30 = scalar_select %p27, %s28, %s29
      %p33 = pneg %p27
      %p34 = scmp.eq.s32.totalorder %s18, 1
      %p35 = por %p33, %p34
      %p36 = scmp.ne.s32.totalorder %s28, %s31
      %p37 = scmp.eq.s32.totalorder %s18, 0
      %p38 = por %p36, %p37
      %p39 = scmp.ne.s32.totalorder %s28, %s31
      %p40 = scmp.eq.s32.totalorder %s23, 1
      %p41 = por %p39, %p40
      %p42 = scmp.ne.s32.totalorder %s31, %s32
      %p43 = scmp.eq.s32.totalorder %s23, 0
      %p44 = por %p42, %p43
      %p45 = scmp.ne.s32.totalorder %s31, %s32
      %p46 = scmp.eq.s32.totalorder %s24, 1
      %p47 = por %p45, %p46
      %p49 = scmp.ne.s32.totalorder %s32, %s48
      %p50 = scmp.eq.s32.totalorder %s24, 0
      %p51 = por %p49, %p50
      %s53 = sadd.s32 %s52, 1
      %p56 = scmp.eq.s32.totalorder %s18, 1
      %p57 = scmp.ne.s32.totalorder %s52, %s54
      %p58 = scmp.eq.s32.totalorder %s18, 0
      %p59 = por %p57, %p58
      %p60 = scmp.ne.s32.totalorder %s52, %s54
      %p61 = scmp.eq.s32.totalorder %s23, 1
      %p62 = por %p60, %p61
      %p63 = scmp.ne.s32.totalorder %s54, %s55
      %p64 = scmp.eq.s32.totalorder %s23, 0
      %p65 = por %p63, %p64
      %p66 = scmp.ne.s32.totalorder %s54, %s55
      %p67 = scmp.eq.s32.totalorder %s24, 1
      %p68 = por %p66, %p67
      %p70 = scmp.ne.s32.totalorder %s55, %s69
      %p71 = scmp.eq.s32.totalorder %s24, 0
      %p72 = por %p70, %p71
      %s74 = sadd.s32 %s73, 1
      %p77 = scmp.eq.s32.totalorder %s18, 1
      %p78 = scmp.ne.s32.totalorder %s73, %s75
      %p79 = scmp.eq.s32.totalorder %s18, 0
      %p80 = por %p78, %p79
      %p81 = scmp.ne.s32.totalorder %s73, %s75
      %p82 = scmp.eq.s32.totalorder %s23, 1
      %p83 = por %p81, %p82
      %p84 = scmp.ne.s32.totalorder %s75, %s76
      %p85 = scmp.eq.s32.totalorder %s23, 0
      %p86 = por %p84, %p85
      %p87 = scmp.ne.s32.totalorder %s75, %s76
      %p88 = scmp.eq.s32.totalorder %s24, 1
      %p89 = por %p87, %p88
      %p91 = scmp.ne.s32.totalorder %s76, %s90
      %p92 = scmp.eq.s32.totalorder %s24, 0
      %p93 = por %p91, %p92
      %s95 = sadd.s32 %s94, 1
      %p98 = scmp.eq.s32.totalorder %s18, 1
      %p99 = scmp.ne.s32.totalorder %s94, %s96
      %p100 = scmp.eq.s32.totalorder %s18, 0
      %p101 = por %p99, %p100
      %p102 = scmp.ne.s32.totalorder %s94, %s96
      %p103 = scmp.eq.s32.totalorder %s23, 1
      %p104 = por %p102, %p103
      %p105 = scmp.ne.s32.totalorder %s96, %s97
      %p106 = scmp.eq.s32.totalorder %s23, 0
      %p107 = por %p105, %p106
      %p108 = scmp.ne.s32.totalorder %s96, %s97
      %p109 = scmp.eq.s32.totalorder %s24, 1
      %p110 = por %p108, %p109
      %p112 = scmp.ne.s32.totalorder %s97, %s111
      %p113 = scmp.eq.s32.totalorder %s24, 0
      %p114 = por %p112, %p113
      %s116 = sadd.s32 %s115, 1
      %p119 = scmp.eq.s32.totalorder %s18, 1
      %p120 = scmp.ne.s32.totalorder %s115, %s117
      %p121 = scmp.eq.s32.totalorder %s18, 0
      %p122 = por %p120, %p121
      %p123 = scmp.ne.s32.totalorder %s115, %s117
      %p124 = scmp.eq.s32.totalorder %s23, 1
      %p125 = por %p123, %p124
      %p126 = scmp.ne.s32.totalorder %s117, %s118
      %p127 = scmp.eq.s32.totalorder %s23, 0
      %p128 = por %p126, %p127
      %p129 = scmp.ne.s32.totalorder %s117, %s118
      %p130 = scmp.eq.s32.totalorder %s24, 1
      %p131 = por %p129, %p130
      %p133 = scmp.ne.s32.totalorder %s118, %s132
      %p134 = scmp.eq.s32.totalorder %s24, 0
      %p135 = por %p133, %p134
      %s137 = sadd.s32 %s136, 1
      %p140 = scmp.eq.s32.totalorder %s18, 1
      %p141 = scmp.ne.s32.totalorder %s136, %s138
      %p142 = scmp.eq.s32.totalorder %s18, 0
      %p143 = por %p141, %p142
      %p144 = scmp.ne.s32.totalorder %s136, %s138
      %p145 = scmp.eq.s32.totalorder %s23, 1
      %p146 = por %p144, %p145
      %p147 = scmp.ne.s32.totalorder %s138, %s139
      %p148 = scmp.eq.s32.totalorder %s23, 0
      %p149 = por %p147, %p148
      %p150 = scmp.ne.s32.totalorder %s138, %s139
      %p151 = scmp.eq.s32.totalorder %s24, 1
      %p152 = por %p150, %p151
      %p154 = scmp.ne.s32.totalorder %s139, %s153
      %p155 = scmp.eq.s32.totalorder %s24, 0
      %p156 = por %p154, %p155
      %s158 = sadd.s32 %s157, 1
      %p161 = scmp.eq.s32.totalorder %s18, 1
      %p162 = scmp.ne.s32.totalorder %s157, %s159
      %p163 = scmp.eq.s32.totalorder %s18, 0
      %p164 = por %p162, %p163
      %p165 = scmp.ne.s32.totalorder %s157, %s159
      %p166 = scmp.eq.s32.totalorder %s23, 1
      %p167 = por %p165, %p166
      %p168 = scmp.ne.s32.totalorder %s159, %s160
      %p169 = scmp.eq.s32.totalorder %s23, 0
      %p170 = por %p168, %p169
      %p171 = scmp.ne.s32.totalorder %s159, %s160
      %p172 = scmp.eq.s32.totalorder %s24, 1
      %p173 = por %p171, %p172
      %p175 = scmp.ne.s32.totalorder %s160, %s174
      %p176 = scmp.eq.s32.totalorder %s24, 0
      %p177 = por %p175, %p176
      %s178 = ssub.s32 %s18, %s25
      %p179 = scmp.eq.s32.totalorder %s178, 0
      %s181 = sadd.s32 %s180, 1
      %s182 = scalar_select %p179, %s180, %s181
      %p185 = pneg %p179
      %p186 = scmp.eq.s32.totalorder %s18, 1
      %p187 = por %p185, %p186
      %p188 = scmp.ne.s32.totalorder %s180, %s183
      %p189 = scmp.eq.s32.totalorder %s18, 0
      %p190 = por %p188, %p189
      %p191 = scmp.ne.s32.totalorder %s180, %s183
      %p192 = scmp.eq.s32.totalorder %s23, 1
      %p193 = por %p191, %p192
      %p194 = scmp.ne.s32.totalorder %s183, %s184
      %p195 = scmp.eq.s32.totalorder %s23, 0
      %p196 = por %p194, %p195
      %p197 = scmp.ne.s32.totalorder %s183, %s184
      %p198 = scmp.eq.s32.totalorder %s24, 1
      %p199 = por %p197, %p198
      %p201 = scmp.ne.s32.totalorder %s184, %s200
      %p202 = scmp.eq.s32.totalorder %s24, 0
      %p203 = por %p201, %p202
      %p204 = scmp.le.s32.totalorder 1, %s18
      %p205 = scmp.lt.s32.totalorder %s18, 3
      %p206 = pnand %p204, %p205
      %p207 = pneg %p206
      // Predicated region
      $region9: #{tpu_custom_call.1} parent=5 // pred_check
        _
      $region10: #{tpu_custom_call.1} parent=5 // pred_check_branch
        %209 = sbr.rel (%p206) target = $region12
      $region11: #{tpu_custom_call.1} parent=5 // pred_region
        %s210 = ssub.s32 %s18, 1
        // Predicated region
        $region13: #{tpu_custom_call.1} parent=11 // pred_check
          %p211 = pneg %p65
        $region14: #{tpu_custom_call.1} parent=11 // pred_check_branch
          %213 = sbr.rel (%p211) target = $region16
        $region15: #{tpu_custom_call.1} parent=11 // pred_region
          %s215 = ssub.s32 2048, 2048
          %216 = vsyncadd [#allocation3], %s215
          %s217 = sshll.u32 [#allocation2], 4
          %s218 = int_to_ptr.vmem [resolvable:$true] %s217
          %223 = dma.hbm_to_vmem [thread:$0]  %s1, 2048, %s218, [#allocation3], 128, 128, 8
        $region16: #{tpu_custom_call.1} parent=11 // pred_fallthru
          _
        // Predicated region
        $region17: #{tpu_custom_call.1} parent=11 // pred_check
          %p224 = pneg %p86
        $region18: #{tpu_custom_call.1} parent=11 // pred_check_branch
          %226 = sbr.rel (%p224) target = $region20
        $region19: #{tpu_custom_call.1} parent=11 // pred_region
          _
        $region20: #{tpu_custom_call.1} parent=11 // pred_fallthru
          _
        // Predicated region
        $region21: #{tpu_custom_call.1} parent=11 // pred_check
          %p227 = pneg %p107
        $region22: #{tpu_custom_call.1} parent=11 // pred_check_branch
          %229 = sbr.rel (%p227) target = $region24
        $region23: #{tpu_custom_call.1} parent=11 // pred_region
          %s231 = ssub.s32 4096, 4096
          %232 = vsyncadd [#allocation6], %s231
          %s233 = sshll.u32 [#allocation5], 4
          %s234 = int_to_ptr.vmem [resolvable:$true] %s233
          %239 = dma.hbm_to_vmem [thread:$0]  %s3, 4096, %s234, [#allocation6], 64, 64, 4
        $region24: #{tpu_custom_call.1} parent=11 // pred_fallthru
          _
        // Predicated region
        $region25: #{tpu_custom_call.1} parent=11 // pred_check
          %p240 = pneg %p128
        $region26: #{tpu_custom_call.1} parent=11 // pred_check_branch
          %242 = sbr.rel (%p240) target = $region28
        $region27: #{tpu_custom_call.1} parent=11 // pred_region
          _
        $region28: #{tpu_custom_call.1} parent=11 // pred_fallthru
          _
        // Predicated region
        $region29: #{tpu_custom_call.1} parent=11 // pred_check
          %p243 = pneg %p149
        $region30: #{tpu_custom_call.1} parent=11 // pred_check_branch
          %245 = sbr.rel (%p243) target = $region32
        $region31: #{tpu_custom_call.1} parent=11 // pred_region
          _
        $region32: #{tpu_custom_call.1} parent=11 // pred_fallthru
          _
        // Predicated region
        $region33: #{tpu_custom_call.1} parent=11 // pred_check
          %p246 = pneg %p170
        $region34: #{tpu_custom_call.1} parent=11 // pred_check_branch
          %248 = sbr.rel (%p246) target = $region36
        $region35: #{tpu_custom_call.1} parent=11 // pred_region
          _
        $region36: #{tpu_custom_call.1} parent=11 // pred_fallthru
          _
      $region12: #{tpu_custom_call.1} parent=5 // pred_fallthru
        _
      %p249 = scmp.lt.s32.totalorder %s18, 2
      // Predicated region
      $region37: #{tpu_custom_call.1} parent=5 // pred_check
        %p250 = pneg %p249
      $region38: #{tpu_custom_call.1} parent=5 // pred_check_branch
        %252 = sbr.rel (%p250) target = $region40
      $region39: #{tpu_custom_call.1} parent=5 // pred_region
        // Predicated region
        $region41: #{tpu_custom_call.1} parent=39 // pred_check
          %p253 = pneg %p38
        $region42: #{tpu_custom_call.1} parent=39 // pred_check_branch
          %255 = sbr.rel (%p253) target = $region44
        $region43: #{tpu_custom_call.1} parent=39 // pred_region
          %s256 = smul.u32 16, %s18
          %p257 = scmp.lt.s32.totalorder %s256, 31
          %s258 = scalar_select %p257, %s256, 31
          %s259 = smul.addr %s258, 8
          %s260 = scalar_lea.vmem %s0, %s259
          %s261 = smul.u32 16, %s18
        $region44: #{tpu_custom_call.1} parent=39 // pred_fallthru
          _
      $region40: #{tpu_custom_call.1} parent=5 // pred_fallthru
        _
      %p262 = scmp.le.s32.totalorder 1, %s18
      %p263 = scmp.lt.s32.totalorder %s18, 3
      %p264 = pnand %p262, %p263
      %p265 = pneg %p264
      // Predicated region
      $region45: #{tpu_custom_call.1} parent=5 // pred_check
        _
      $region46: #{tpu_custom_call.1} parent=5 // pred_check_branch
        %267 = sbr.rel (%p264) target = $region48
      $region47: #{tpu_custom_call.1} parent=5 // pred_region
        %s268 = ssub.s32 %s18, 1
        // Predicated region
        $region49: #{tpu_custom_call.1} parent=47 // pred_check
          %p269 = pneg %p65
        $region50: #{tpu_custom_call.1} parent=47 // pred_check_branch
          %271 = sbr.rel (%p269) target = $region52
        $region51: #{tpu_custom_call.1} parent=47 // pred_region
          %272 = dma.done [#allocation3], 2048
        $region52: #{tpu_custom_call.1} parent=47 // pred_fallthru
          _
        // Predicated region
        $region53: #{tpu_custom_call.1} parent=47 // pred_check
          %p273 = pneg %p107
        $region54: #{tpu_custom_call.1} parent=47 // pred_check_branch
          %275 = sbr.rel (%p273) target = $region56
        $region55: #{tpu_custom_call.1} parent=47 // pred_region
          %276 = dma.done [#allocation6], 4096
        $region56: #{tpu_custom_call.1} parent=47 // pred_fallthru
          _
        %s277 = smul.u32 16, %s23
        %p278 = scmp.lt.s32.totalorder %s277, 31
        %s279 = scalar_select %p278, %s277, 31
        %s280 = smul.addr %s279, 8
        %s281 = scalar_lea.vmem %s0, %s280
        %p282 = pneg %p44
        %p283 = pneg %p41
        %p284 = pneg %p65
        %p285 = pneg %p62
        %p286 = pneg %p86
        %p287 = pneg %p83
        %p288 = pneg %p107
        %p289 = pneg %p104
        %p290 = pneg %p128
        %p291 = pneg %p125
        %p292 = pneg %p149
        %p293 = pneg %p146
        %p294 = pneg %p170
        %p295 = pneg %p167
        %p296 = pneg %p196
        %p297 = pneg %p193
        %s298 = sand.u32 %s183, 1
        %s299 = scalar_lea.sflag [#allocation4], %s298
        %s300 = sand.u32 %s183, 1
        %s301 = smul.addr %s300, 128
        %s302 = scalar_lea.vmem [#allocation7], %s301
        %s303 = smul.u32 16, %s23
        %p304 = scmp.lt.s32.totalorder %s303, 31
        %s305 = scalar_select %p304, %s303, 31
        %s306 = smul.addr %s305, 8
        %s307 = scalar_lea.vmem %s0, %s306
        %s308 = smul.u32 16, %s23
        %s309 = smul.u32 16, %s23
        %v311 = vld [vmem:[%s307] sm:$0xff]
        %v312 = vld [vmem:[%s307 + $0x8] sm:$0xff]
        %v313 = vld [vmem:[%s307 + $0x10] sm:$0xff]
        %v314 = vld [vmem:[%s307 + $0x18] sm:$0xff]
        %v315 = vld [vmem:[%s307 + $0x20] sm:$0xff]
        %v316 = vld [vmem:[%s307 + $0x28] sm:$0xff]
        %v317 = vld [vmem:[%s307 + $0x30] sm:$0xff]
        %v318 = vld [vmem:[%s307 + $0x38] sm:$0xff]
        %v319 = vld [vmem:[%s307 + $0x40] sm:$0xff]
        %v320 = vld [vmem:[%s307 + $0x48] sm:$0xff]
        %v321 = vld [vmem:[%s307 + $0x50] sm:$0xff]
        %v322 = vld [vmem:[%s307 + $0x58] sm:$0xff]
        %v323 = vld [vmem:[%s307 + $0x60] sm:$0xff]
        %v324 = vld [vmem:[%s307 + $0x68] sm:$0xff]
        %v325 = vld [vmem:[%s307 + $0x70] sm:$0xff]
        %v326 = vld [vmem:[%s307 + $0x78] sm:$0xff]
        %v327 = vlaneseq
        %v328 = vand.u32 %v327, 127
        %v329 = vadd.s32 %v328, 128
        %v330 = vadd.s32 %v328, 256
        %v331 = vadd.s32 %v328, 384
        %332 = vset.pattern.permute.xlu0 0
        %333 = vperm.xlu0 %332, %v311
        %v334 = vpop.permute.xlu0 %333
        %335 = vset.pattern.permute.xlu0 0
        %336 = vperm.xlu0 %335, %v312
        %v337 = vpop.permute.xlu0 %336
        %338 = vset.pattern.permute.xlu0 0
        %339 = vperm.xlu0 %338, %v313
        %v340 = vpop.permute.xlu0 %339
        %341 = vset.pattern.permute.xlu0 0
        %342 = vperm.xlu0 %341, %v314
        %v343 = vpop.permute.xlu0 %342
        %344 = vset.pattern.permute.xlu0 0
        %345 = vperm.xlu0 %344, %v315
        %v346 = vpop.permute.xlu0 %345
        %347 = vset.pattern.permute.xlu0 0
        %348 = vperm.xlu0 %347, %v316
        %v349 = vpop.permute.xlu0 %348
        %350 = vset.pattern.permute.xlu0 0
        %351 = vperm.xlu0 %350, %v317
        %v352 = vpop.permute.xlu0 %351
        %353 = vset.pattern.permute.xlu0 0
        %354 = vperm.xlu0 %353, %v318
        %v355 = vpop.permute.xlu0 %354
        %356 = vset.pattern.permute.xlu0 0
        %357 = vperm.xlu0 %356, %v319
        %v358 = vpop.permute.xlu0 %357
        %359 = vset.pattern.permute.xlu0 0
        %360 = vperm.xlu0 %359, %v320
        %v361 = vpop.permute.xlu0 %360
        %362 = vset.pattern.permute.xlu0 0
        %363 = vperm.xlu0 %362, %v321
        %v364 = vpop.permute.xlu0 %363
        %365 = vset.pattern.permute.xlu0 0
        %366 = vperm.xlu0 %365, %v322
        %v367 = vpop.permute.xlu0 %366
        %368 = vset.pattern.permute.xlu0 0
        %369 = vperm.xlu0 %368, %v323
        %v370 = vpop.permute.xlu0 %369
        %371 = vset.pattern.permute.xlu0 0
        %372 = vperm.xlu0 %371, %v324
        %v373 = vpop.permute.xlu0 %372
        %374 = vset.pattern.permute.xlu0 0
        %375 = vperm.xlu0 %374, %v325
        %v376 = vpop.permute.xlu0 %375
        %377 = vset.pattern.permute.xlu0 0
        %378 = vperm.xlu0 %377, %v326
        %v379 = vpop.permute.xlu0 %378
        %vm380 = vcmp.eq.s32.totalorder %v328, %v334
        %vm381 = vcmp.eq.s32.totalorder %v329, %v334
        %vm382 = vcmp.eq.s32.totalorder %v330, %v334
        %vm383 = vcmp.eq.s32.totalorder %v331, %v334
        %vm384 = vcmp.eq.s32.totalorder %v328, %v337
        %vm385 = vcmp.eq.s32.totalorder %v329, %v337
        %vm386 = vcmp.eq.s32.totalorder %v330, %v337
        %vm387 = vcmp.eq.s32.totalorder %v331, %v337
        %vm388 = vcmp.eq.s32.totalorder %v328, %v340
        %vm389 = vcmp.eq.s32.totalorder %v329, %v340
        %vm390 = vcmp.eq.s32.totalorder %v330, %v340
        %vm391 = vcmp.eq.s32.totalorder %v331, %v340
        %vm392 = vcmp.eq.s32.totalorder %v328, %v343
        %vm393 = vcmp.eq.s32.totalorder %v329, %v343
        %vm394 = vcmp.eq.s32.totalorder %v330, %v343
        %vm395 = vcmp.eq.s32.totalorder %v331, %v343
        %vm396 = vcmp.eq.s32.totalorder %v328, %v346
        %vm397 = vcmp.eq.s32.totalorder %v329, %v346
        %vm398 = vcmp.eq.s32.totalorder %v330, %v346
        %vm399 = vcmp.eq.s32.totalorder %v331, %v346
        %vm400 = vcmp.eq.s32.totalorder %v328, %v349
        %vm401 = vcmp.eq.s32.totalorder %v329, %v349
        %vm402 = vcmp.eq.s32.totalorder %v330, %v349
        %vm403 = vcmp.eq.s32.totalorder %v331, %v349
        %vm404 = vcmp.eq.s32.totalorder %v328, %v352
        %vm405 = vcmp.eq.s32.totalorder %v329, %v352
        %vm406 = vcmp.eq.s32.totalorder %v330, %v352
        %vm407 = vcmp.eq.s32.totalorder %v331, %v352
        %vm408 = vcmp.eq.s32.totalorder %v328, %v355
        %vm409 = vcmp.eq.s32.totalorder %v329, %v355
        %vm410 = vcmp.eq.s32.totalorder %v330, %v355
        %vm411 = vcmp.eq.s32.totalorder %v331, %v355
        %vm412 = vcmp.eq.s32.totalorder %v328, %v358
        %vm413 = vcmp.eq.s32.totalorder %v329, %v358
        %vm414 = vcmp.eq.s32.totalorder %v330, %v358
        %vm415 = vcmp.eq.s32.totalorder %v331, %v358
        %vm416 = vcmp.eq.s32.totalorder %v328, %v361
        %vm417 = vcmp.eq.s32.totalorder %v329, %v361
        %vm418 = vcmp.eq.s32.totalorder %v330, %v361
        %vm419 = vcmp.eq.s32.totalorder %v331, %v361
        %vm420 = vcmp.eq.s32.totalorder %v328, %v364
        %vm421 = vcmp.eq.s32.totalorder %v329, %v364
        %vm422 = vcmp.eq.s32.totalorder %v330, %v364
        %vm423 = vcmp.eq.s32.totalorder %v331, %v364
        %vm424 = vcmp.eq.s32.totalorder %v328, %v367
        %vm425 = vcmp.eq.s32.totalorder %v329, %v367
        %vm426 = vcmp.eq.s32.totalorder %v330, %v367
        %vm427 = vcmp.eq.s32.totalorder %v331, %v367
        %vm428 = vcmp.eq.s32.totalorder %v328, %v370
        %vm429 = vcmp.eq.s32.totalorder %v329, %v370
        %vm430 = vcmp.eq.s32.totalorder %v330, %v370
        %vm431 = vcmp.eq.s32.totalorder %v331, %v370
        %vm432 = vcmp.eq.s32.totalorder %v328, %v373
        %vm433 = vcmp.eq.s32.totalorder %v329, %v373
        %vm434 = vcmp.eq.s32.totalorder %v330, %v373
        %vm435 = vcmp.eq.s32.totalorder %v331, %v373
        %vm436 = vcmp.eq.s32.totalorder %v328, %v376
        %vm437 = vcmp.eq.s32.totalorder %v329, %v376
        %vm438 = vcmp.eq.s32.totalorder %v330, %v376
        %vm439 = vcmp.eq.s32.totalorder %v331, %v376
        %vm440 = vcmp.eq.s32.totalorder %v328, %v379
        %vm441 = vcmp.eq.s32.totalorder %v329, %v379
        %vm442 = vcmp.eq.s32.totalorder %v330, %v379
        %vm443 = vcmp.eq.s32.totalorder %v331, %v379
        %v444 = vsel %vm380, 1, 0
        %v445 = vsel %vm381, 1, 0
        %v446 = vsel %vm382, 1, 0
        %v447 = vsel %vm383, 1, 0
        %v448 = vsel %vm384, 1, 0
        %v449 = vsel %vm385, 1, 0
        %v450 = vsel %vm386, 1, 0
        %v451 = vsel %vm387, 1, 0
        %v452 = vsel %vm388, 1, 0
        %v453 = vsel %vm389, 1, 0
        %v454 = vsel %vm390, 1, 0
        %v455 = vsel %vm391, 1, 0
        %v456 = vsel %vm392, 1, 0
        %v457 = vsel %vm393, 1, 0
        %v458 = vsel %vm394, 1, 0
        %v459 = vsel %vm395, 1, 0
        %v460 = vsel %vm396, 1, 0
        %v461 = vsel %vm397, 1, 0
        %v462 = vsel %vm398, 1, 0
        %v463 = vsel %vm399, 1, 0
        %v464 = vsel %vm400, 1, 0
        %v465 = vsel %vm401, 1, 0
        %v466 = vsel %vm402, 1, 0
        %v467 = vsel %vm403, 1, 0
        %v468 = vsel %vm404, 1, 0
        %v469 = vsel %vm405, 1, 0
        %v470 = vsel %vm406, 1, 0
        %v471 = vsel %vm407, 1, 0
        %v472 = vsel %vm408, 1, 0
        %v473 = vsel %vm409, 1, 0
        %v474 = vsel %vm410, 1, 0
        %v475 = vsel %vm411, 1, 0
        %v476 = vsel %vm412, 1, 0
        %v477 = vsel %vm413, 1, 0
        %v478 = vsel %vm414, 1, 0
        %v479 = vsel %vm415, 1, 0
        %v480 = vsel %vm416, 1, 0
        %v481 = vsel %vm417, 1, 0
        %v482 = vsel %vm418, 1, 0
        %v483 = vsel %vm419, 1, 0
        %v484 = vsel %vm420, 1, 0
        %v485 = vsel %vm421, 1, 0
        %v486 = vsel %vm422, 1, 0
        %v487 = vsel %vm423, 1, 0
        %v488 = vsel %vm424, 1, 0
        %v489 = vsel %vm425, 1, 0
        %v490 = vsel %vm426, 1, 0
        %v491 = vsel %vm427, 1, 0
        %v492 = vsel %vm428, 1, 0
        %v493 = vsel %vm429, 1, 0
        %v494 = vsel %vm430, 1, 0
        %v495 = vsel %vm431, 1, 0
        %v496 = vsel %vm432, 1, 0
        %v497 = vsel %vm433, 1, 0
        %v498 = vsel %vm434, 1, 0
        %v499 = vsel %vm435, 1, 0
        %v500 = vsel %vm436, 1, 0
        %v501 = vsel %vm437, 1, 0
        %v502 = vsel %vm438, 1, 0
        %v503 = vsel %vm439, 1, 0
        %v504 = vsel %vm440, 1, 0
        %v505 = vsel %vm441, 1, 0
        %v506 = vsel %vm442, 1, 0
        %v507 = vsel %vm443, 1, 0
        %v508 = vcvt.s32.f32 %v444
        %v509 = vcvt.s32.f32 %v445
        %v510 = vcvt.s32.f32 %v446
        %v511 = vcvt.s32.f32 %v447
        %v512 = vcvt.s32.f32 %v448
        %v513 = vcvt.s32.f32 %v449
        %v514 = vcvt.s32.f32 %v450
        %v515 = vcvt.s32.f32 %v451
        %v516 = vcvt.s32.f32 %v452
        %v517 = vcvt.s32.f32 %v453
        %v518 = vcvt.s32.f32 %v454
        %v519 = vcvt.s32.f32 %v455
        %v520 = vcvt.s32.f32 %v456
        %v521 = vcvt.s32.f32 %v457
        %v522 = vcvt.s32.f32 %v458
        %v523 = vcvt.s32.f32 %v459
        %v524 = vcvt.s32.f32 %v460
        %v525 = vcvt.s32.f32 %v461
        %v526 = vcvt.s32.f32 %v462
        %v527 = vcvt.s32.f32 %v463
        %v528 = vcvt.s32.f32 %v464
        %v529 = vcvt.s32.f32 %v465
        %v530 = vcvt.s32.f32 %v466
        %v531 = vcvt.s32.f32 %v467
        %v532 = vcvt.s32.f32 %v468
        %v533 = vcvt.s32.f32 %v469
        %v534 = vcvt.s32.f32 %v470
        %v535 = vcvt.s32.f32 %v471
        %v536 = vcvt.s32.f32 %v472
        %v537 = vcvt.s32.f32 %v473
        %v538 = vcvt.s32.f32 %v474
        %v539 = vcvt.s32.f32 %v475
        %v540 = vcvt.s32.f32 %v476
        %v541 = vcvt.s32.f32 %v477
        %v542 = vcvt.s32.f32 %v478
        %v543 = vcvt.s32.f32 %v479
        %v544 = vcvt.s32.f32 %v480
        %v545 = vcvt.s32.f32 %v481
        %v546 = vcvt.s32.f32 %v482
        %v547 = vcvt.s32.f32 %v483
        %v548 = vcvt.s32.f32 %v484
        %v549 = vcvt.s32.f32 %v485
        %v550 = vcvt.s32.f32 %v486
        %v551 = vcvt.s32.f32 %v487
        %v552 = vcvt.s32.f32 %v488
        %v553 = vcvt.s32.f32 %v489
        %v554 = vcvt.s32.f32 %v490
        %v555 = vcvt.s32.f32 %v491
        %v556 = vcvt.s32.f32 %v492
        %v557 = vcvt.s32.f32 %v493
        %v558 = vcvt.s32.f32 %v494
        %v559 = vcvt.s32.f32 %v495
        %v560 = vcvt.s32.f32 %v496
        %v561 = vcvt.s32.f32 %v497
        %v562 = vcvt.s32.f32 %v498
        %v563 = vcvt.s32.f32 %v499
        %v564 = vcvt.s32.f32 %v500
        %v565 = vcvt.s32.f32 %v501
        %v566 = vcvt.s32.f32 %v502
        %v567 = vcvt.s32.f32 %v503
        %v568 = vcvt.s32.f32 %v504
        %v569 = vcvt.s32.f32 %v505
        %v570 = vcvt.s32.f32 %v506
        %v571 = vcvt.s32.f32 %v507
        %v572 = vpack.c.bf16 %v512, %v508
        %v573 = vpack.c.bf16 %v513, %v509
        %v574 = vpack.c.bf16 %v514, %v510
        %v575 = vpack.c.bf16 %v515, %v511
        %v576 = vpack.c.bf16 %v520, %v516
        %v577 = vpack.c.bf16 %v521, %v517
        %v578 = vpack.c.bf16 %v522, %v518
        %v579 = vpack.c.bf16 %v523, %v519
        %v580 = vpack.c.bf16 %v528, %v524
        %v581 = vpack.c.bf16 %v529, %v525
        %v582 = vpack.c.bf16 %v530, %v526
        %v583 = vpack.c.bf16 %v531, %v527
        %v584 = vpack.c.bf16 %v536, %v532
        %v585 = vpack.c.bf16 %v537, %v533
        %v586 = vpack.c.bf16 %v538, %v534
        %v587 = vpack.c.bf16 %v539, %v535
        %v588 = vpack.c.bf16 %v544, %v540
        %v589 = vpack.c.bf16 %v545, %v541
        %v590 = vpack.c.bf16 %v546, %v542
        %v591 = vpack.c.bf16 %v547, %v543
        %v592 = vpack.c.bf16 %v552, %v548
        %v593 = vpack.c.bf16 %v553, %v549
        %v594 = vpack.c.bf16 %v554, %v550
        %v595 = vpack.c.bf16 %v555, %v551
        %v596 = vpack.c.bf16 %v560, %v556
        %v597 = vpack.c.bf16 %v561, %v557
        %v598 = vpack.c.bf16 %v562, %v558
        %v599 = vpack.c.bf16 %v563, %v559
        %v600 = vpack.c.bf16 %v568, %v564
        %v601 = vpack.c.bf16 %v569, %v565
        %v602 = vpack.c.bf16 %v570, %v566
        %v603 = vpack.c.bf16 %v571, %v567
        %v604 = vld [vmem:[%s2] sm:$0xf]
        %v605 = vld [vmem:[%s2 + $0x4] sm:$0xf]
        %v606 = vld [vmem:[%s2 + $0x8] sm:$0xf]
        %v607 = vld [vmem:[%s2 + $0xc] sm:$0xf]
        %v608 = vld [vmem:[%s2 + $0x10] sm:$0xf]
        %v609 = vld [vmem:[%s2 + $0x14] sm:$0xf]
        %v610 = vld [vmem:[%s2 + $0x18] sm:$0xf]
        %v611 = vld [vmem:[%s2 + $0x1c] sm:$0xf]
        %v612 = vld [vmem:[%s2 + $0x20] sm:$0xf]
        %v613 = vld [vmem:[%s2 + $0x24] sm:$0xf]
        %v614 = vld [vmem:[%s2 + $0x28] sm:$0xf]
        %v615 = vld [vmem:[%s2 + $0x2c] sm:$0xf]
        %v616 = vld [vmem:[%s2 + $0x30] sm:$0xf]
        %v617 = vld [vmem:[%s2 + $0x34] sm:$0xf]
        %v618 = vld [vmem:[%s2 + $0x38] sm:$0xf]
        %v619 = vld [vmem:[%s2 + $0x3c] sm:$0xf]
        %v620 = vld [vmem:[%s2 + $0x40] sm:$0xf]
        %v621 = vld [vmem:[%s2 + $0x44] sm:$0xf]
        %v622 = vld [vmem:[%s2 + $0x48] sm:$0xf]
        %v623 = vld [vmem:[%s2 + $0x4c] sm:$0xf]
        %v624 = vld [vmem:[%s2 + $0x50] sm:$0xf]
        %v625 = vld [vmem:[%s2 + $0x54] sm:$0xf]
        %v626 = vld [vmem:[%s2 + $0x58] sm:$0xf]
        %v627 = vld [vmem:[%s2 + $0x5c] sm:$0xf]
        %v628 = vld [vmem:[%s2 + $0x60] sm:$0xf]
        %v629 = vld [vmem:[%s2 + $0x64] sm:$0xf]
        %v630 = vld [vmem:[%s2 + $0x68] sm:$0xf]
        %v631 = vld [vmem:[%s2 + $0x6c] sm:$0xf]
        %v632 = vld [vmem:[%s2 + $0x70] sm:$0xf]
        %v633 = vld [vmem:[%s2 + $0x74] sm:$0xf]
        %v634 = vld [vmem:[%s2 + $0x78] sm:$0xf]
        %v635 = vld [vmem:[%s2 + $0x7c] sm:$0xf]
        %v636 = vld [vmem:[%s2 + $0x80] sm:$0xf]
        %v637 = vld [vmem:[%s2 + $0x84] sm:$0xf]
        %v638 = vld [vmem:[%s2 + $0x88] sm:$0xf]
        %v639 = vld [vmem:[%s2 + $0x8c] sm:$0xf]
        %v640 = vld [vmem:[%s2 + $0x90] sm:$0xf]
        %v641 = vld [vmem:[%s2 + $0x94] sm:$0xf]
        %v642 = vld [vmem:[%s2 + $0x98] sm:$0xf]
        %v643 = vld [vmem:[%s2 + $0x9c] sm:$0xf]
        %v644 = vld [vmem:[%s2 + $0xa0] sm:$0xf]
        %v645 = vld [vmem:[%s2 + $0xa4] sm:$0xf]
        %v646 = vld [vmem:[%s2 + $0xa8] sm:$0xf]
        %v647 = vld [vmem:[%s2 + $0xac] sm:$0xf]
        %v648 = vld [vmem:[%s2 + $0xb0] sm:$0xf]
        %v649 = vld [vmem:[%s2 + $0xb4] sm:$0xf]
        %v650 = vld [vmem:[%s2 + $0xb8] sm:$0xf]
        %v651 = vld [vmem:[%s2 + $0xbc] sm:$0xf]
        %v652 = vld [vmem:[%s2 + $0xc0] sm:$0xf]
        %v653 = vld [vmem:[%s2 + $0xc4] sm:$0xf]
        %v654 = vld [vmem:[%s2 + $0xc8] sm:$0xf]
        %v655 = vld [vmem:[%s2 + $0xcc] sm:$0xf]
        %v656 = vld [vmem:[%s2 + $0xd0] sm:$0xf]
        %v657 = vld [vmem:[%s2 + $0xd4] sm:$0xf]
        %v658 = vld [vmem:[%s2 + $0xd8] sm:$0xf]
        %v659 = vld [vmem:[%s2 + $0xdc] sm:$0xf]
        %v660 = vld [vmem:[%s2 + $0xe0] sm:$0xf]
        %v661 = vld [vmem:[%s2 + $0xe4] sm:$0xf]
        %v662 = vld [vmem:[%s2 + $0xe8] sm:$0xf]
        %v663 = vld [vmem:[%s2 + $0xec] sm:$0xf]
        %v664 = vld [vmem:[%s2 + $0xf0] sm:$0xf]
        %v665 = vld [vmem:[%s2 + $0xf4] sm:$0xf]
        %v666 = vld [vmem:[%s2 + $0xf8] sm:$0xf]
        %v667 = vld [vmem:[%s2 + $0xfc] sm:$0xf]
        %v668 = vld [vmem:[#allocation5] sm:$0xf]
        %v669 = vld [vmem:[#allocation5 + $0x4] sm:$0xf]
        %v670 = vld [vmem:[#allocation5 + $0x8] sm:$0xf]
        %v671 = vld [vmem:[#allocation5 + $0xc] sm:$0xf]
        %v672 = vld [vmem:[#allocation5 + $0x10] sm:$0xf]
        %v673 = vld [vmem:[#allocation5 + $0x14] sm:$0xf]
        %v674 = vld [vmem:[#allocation5 + $0x18] sm:$0xf]
        %v675 = vld [vmem:[#allocation5 + $0x1c] sm:$0xf]
        %v676 = vld [vmem:[#allocation5 + $0x20] sm:$0xf]
        %v677 = vld [vmem:[#allocation5 + $0x24] sm:$0xf]
        %v678 = vld [vmem:[#allocation5 + $0x28] sm:$0xf]
        %v679 = vld [vmem:[#allocation5 + $0x2c] sm:$0xf]
        %v680 = vld [vmem:[#allocation5 + $0x30] sm:$0xf]
        %v681 = vld [vmem:[#allocation5 + $0x34] sm:$0xf]
        %v682 = vld [vmem:[#allocation5 + $0x38] sm:$0xf]
        %v683 = vld [vmem:[#allocation5 + $0x3c] sm:$0xf]
        %v684 = vld [vmem:[#allocation5 + $0x40] sm:$0xf]
        %v685 = vld [vmem:[#allocation5 + $0x44] sm:$0xf]
        %v686 = vld [vmem:[#allocation5 + $0x48] sm:$0xf]
        %v687 = vld [vmem:[#allocation5 + $0x4c] sm:$0xf]
        %v688 = vld [vmem:[#allocation5 + $0x50] sm:$0xf]
        %v689 = vld [vmem:[#allocation5 + $0x54] sm:$0xf]
        %v690 = vld [vmem:[#allocation5 + $0x58] sm:$0xf]
        %v691 = vld [vmem:[#allocation5 + $0x5c] sm:$0xf]
        %v692 = vld [vmem:[#allocation5 + $0x60] sm:$0xf]
        %v693 = vld [vmem:[#allocation5 + $0x64] sm:$0xf]
        %v694 = vld [vmem:[#allocation5 + $0x68] sm:$0xf]
        %v695 = vld [vmem:[#allocation5 + $0x6c] sm:$0xf]
        %v696 = vld [vmem:[#allocation5 + $0x70] sm:$0xf]
        %v697 = vld [vmem:[#allocation5 + $0x74] sm:$0xf]
        %v698 = vld [vmem:[#allocation5 + $0x78] sm:$0xf]
        %v699 = vld [vmem:[#allocation5 + $0x7c] sm:$0xf]
        %v700 = vld [vmem:[#allocation5 + $0x80] sm:$0xf]
        %v701 = vld [vmem:[#allocation5 + $0x84] sm:$0xf]
        %v702 = vld [vmem:[#allocation5 + $0x88] sm:$0xf]
        %v703 = vld [vmem:[#allocation5 + $0x8c] sm:$0xf]
        %v704 = vld [vmem:[#allocation5 + $0x90] sm:$0xf]
        %v705 = vld [vmem:[#allocation5 + $0x94] sm:$0xf]
        %v706 = vld [vmem:[#allocation5 + $0x98] sm:$0xf]
        %v707 = vld [vmem:[#allocation5 + $0x9c] sm:$0xf]
        %v708 = vld [vmem:[#allocation5 + $0xa0] sm:$0xf]
        %v709 = vld [vmem:[#allocation5 + $0xa4] sm:$0xf]
        %v710 = vld [vmem:[#allocation5 + $0xa8] sm:$0xf]
        %v711 = vld [vmem:[#allocation5 + $0xac] sm:$0xf]
        %v712 = vld [vmem:[#allocation5 + $0xb0] sm:$0xf]
        %v713 = vld [vmem:[#allocation5 + $0xb4] sm:$0xf]
        %v714 = vld [vmem:[#allocation5 + $0xb8] sm:$0xf]
        %v715 = vld [vmem:[#allocation5 + $0xbc] sm:$0xf]
        %v716 = vld [vmem:[#allocation5 + $0xc0] sm:$0xf]
        %v717 = vld [vmem:[#allocation5 + $0xc4] sm:$0xf]
        %v718 = vld [vmem:[#allocation5 + $0xc8] sm:$0xf]
        %v719 = vld [vmem:[#allocation5 + $0xcc] sm:$0xf]
        %v720 = vld [vmem:[#allocation5 + $0xd0] sm:$0xf]
        %v721 = vld [vmem:[#allocation5 + $0xd4] sm:$0xf]
        %v722 = vld [vmem:[#allocation5 + $0xd8] sm:$0xf]
        %v723 = vld [vmem:[#allocation5 + $0xdc] sm:$0xf]
        %v724 = vld [vmem:[#allocation5 + $0xe0] sm:$0xf]
        %v725 = vld [vmem:[#allocation5 + $0xe4] sm:$0xf]
        %v726 = vld [vmem:[#allocation5 + $0xe8] sm:$0xf]
        %v727 = vld [vmem:[#allocation5 + $0xec] sm:$0xf]
        %v728 = vld [vmem:[#allocation5 + $0xf0] sm:$0xf]
        %v729 = vld [vmem:[#allocation5 + $0xf4] sm:$0xf]
        %v730 = vld [vmem:[#allocation5 + $0xf8] sm:$0xf]
        %v731 = vld [vmem:[#allocation5 + $0xfc] sm:$0xf]
        %v796 = vunpack.c.l.b16 %v668
        %v797 = vunpack.c.l.b16 %v669
        %v798 = vunpack.c.l.b16 %v670
        %v799 = vunpack.c.l.b16 %v671
        %v800 = vunpack.c.l.b16 %v672
        %v801 = vunpack.c.l.b16 %v673
        %v802 = vunpack.c.l.b16 %v674
        %v803 = vunpack.c.l.b16 %v675
        %v804 = vunpack.c.l.b16 %v676
        %v805 = vunpack.c.l.b16 %v677
        %v806 = vunpack.c.l.b16 %v678
        %v807 = vunpack.c.l.b16 %v679
        %v808 = vunpack.c.l.b16 %v680
        %v809 = vunpack.c.l.b16 %v681
        %v810 = vunpack.c.l.b16 %v682
        %v811 = vunpack.c.l.b16 %v683
        %v812 = vunpack.c.l.b16 %v684
        %v813 = vunpack.c.l.b16 %v685
        %v814 = vunpack.c.l.b16 %v686
        %v815 = vunpack.c.l.b16 %v687
        %v816 = vunpack.c.l.b16 %v688
        %v817 = vunpack.c.l.b16 %v689
        %v818 = vunpack.c.l.b16 %v690
        %v819 = vunpack.c.l.b16 %v691
        %v820 = vunpack.c.l.b16 %v692
        %v821 = vunpack.c.l.b16 %v693
        %v822 = vunpack.c.l.b16 %v694
        %v823 = vunpack.c.l.b16 %v695
        %v824 = vunpack.c.l.b16 %v696
        %v825 = vunpack.c.l.b16 %v697
        %v826 = vunpack.c.l.b16 %v698
        %v827 = vunpack.c.l.b16 %v699
        %v828 = vunpack.c.l.b16 %v700
        %v829 = vunpack.c.l.b16 %v701
        %v830 = vunpack.c.l.b16 %v702
        %v831 = vunpack.c.l.b16 %v703
        %v832 = vunpack.c.l.b16 %v704
        %v833 = vunpack.c.l.b16 %v705
        %v834 = vunpack.c.l.b16 %v706
        %v835 = vunpack.c.l.b16 %v707
        %v836 = vunpack.c.l.b16 %v708
        %v837 = vunpack.c.l.b16 %v709
        %v838 = vunpack.c.l.b16 %v710
        %v839 = vunpack.c.l.b16 %v711
        %v840 = vunpack.c.l.b16 %v712
        %v841 = vunpack.c.l.b16 %v713
        %v842 = vunpack.c.l.b16 %v714
        %v843 = vunpack.c.l.b16 %v715
        %v844 = vunpack.c.l.b16 %v716
        %v845 = vunpack.c.l.b16 %v717
        %v846 = vunpack.c.l.b16 %v718
        %v847 = vunpack.c.l.b16 %v719
        %v848 = vunpack.c.l.b16 %v720
        %v849 = vunpack.c.l.b16 %v721
        %v850 = vunpack.c.l.b16 %v722
        %v851 = vunpack.c.l.b16 %v723
        %v852 = vunpack.c.l.b16 %v724
        %v853 = vunpack.c.l.b16 %v725
        %v854 = vunpack.c.l.b16 %v726
        %v855 = vunpack.c.l.b16 %v727
        %v856 = vunpack.c.l.b16 %v728
        %v857 = vunpack.c.l.b16 %v729
        %v858 = vunpack.c.l.b16 %v730
        %v859 = vunpack.c.l.b16 %v731
        %v860 = vpack.c.b16 %v797, %v796
        %v861 = vpack.c.b16 %v799, %v798
        %v862 = vpack.c.b16 %v801, %v800
        %v863 = vpack.c.b16 %v803, %v802
        %v864 = vpack.c.b16 %v805, %v804
        %v865 = vpack.c.b16 %v807, %v806
        %v866 = vpack.c.b16 %v809, %v808
        %v867 = vpack.c.b16 %v811, %v810
        %v868 = vpack.c.b16 %v813, %v812
        %v869 = vpack.c.b16 %v815, %v814
        %v870 = vpack.c.b16 %v817, %v816
        %v871 = vpack.c.b16 %v819, %v818
        %v872 = vpack.c.b16 %v821, %v820
        %v873 = vpack.c.b16 %v823, %v822
        %v874 = vpack.c.b16 %v825, %v824
        %v875 = vpack.c.b16 %v827, %v826
        %v876 = vpack.c.b16 %v829, %v828
        %v877 = vpack.c.b16 %v831, %v830
        %v878 = vpack.c.b16 %v833, %v832
        %v879 = vpack.c.b16 %v835, %v834
        %v880 = vpack.c.b16 %v837, %v836
        %v881 = vpack.c.b16 %v839, %v838
        %v882 = vpack.c.b16 %v841, %v840
        %v883 = vpack.c.b16 %v843, %v842
        %v884 = vpack.c.b16 %v845, %v844
        %v885 = vpack.c.b16 %v847, %v846
        %v886 = vpack.c.b16 %v849, %v848
        %v887 = vpack.c.b16 %v851, %v850
        %v888 = vpack.c.b16 %v853, %v852
        %v889 = vpack.c.b16 %v855, %v854
        %v890 = vpack.c.b16 %v857, %v856
        %v891 = vpack.c.b16 %v859, %v858
        %924 = vmatprep.subr.bf16.mxu0 0
        %925 = vmatpush1.bf16.msra.mxu0 %v867
        %926 = vmatprep.subr.bf16.mxu0 0
        %927 = vmatpush1.bf16.msra.mxu0 %v866
        %928 = vmatprep.subr.bf16.mxu0 0
        %929 = vmatpush1.bf16.msra.mxu0 %v865
        %930 = vmatprep.subr.bf16.mxu0 0
        %931 = vmatpush1.bf16.msra.mxu0 %v864
        %932 = vmatprep.subr.bf16.mxu0 0
        %933 = vmatpush1.bf16.msra.mxu0 %v863
        %934 = vmatprep.subr.bf16.mxu0 0
        %935 = vmatpush1.bf16.msra.mxu0 %v862
        %936 = vmatprep.subr.bf16.mxu0 0
        %937 = vmatpush1.bf16.msra.mxu0 %v861
        %938 = vmatprep.subr.bf16.mxu0 0
        %939 = vmatpush1.bf16.msra.mxu0 %v860
        %940 = vmatprep.subr.bf16.mxu0 0
        %941 = vmatpush2.bf16.msra.mxu0 %v875
        %942 = vmatprep.subr.bf16.mxu0 0
        %943 = vmatpush2.bf16.msra.mxu0 %v874
        %944 = vmatprep.subr.bf16.mxu0 0
        %945 = vmatpush2.bf16.msra.mxu0 %v873
        %946 = vmatprep.subr.bf16.mxu0 0
        %947 = vmatpush2.bf16.msra.mxu0 %v872
        %948 = vmatprep.subr.bf16.mxu0 0
        %949 = vmatpush2.bf16.msra.mxu0 %v871
        %950 = vmatprep.subr.bf16.mxu0 0
        %951 = vmatpush2.bf16.msra.mxu0 %v870
        %952 = vmatprep.subr.bf16.mxu0 0
        %953 = vmatpush2.bf16.msra.mxu0 %v869
        %954 = vmatprep.subr.bf16.mxu0 0
        %955 = vmatpush2.bf16.msra.mxu0 %v868
        %956 = vmatprep.mubr.bf16.mxu0 %v573
        %957 = vmatmul.mubr.bf16.gmra.mxu0 %v572
        %v958 = vpop.f32.mrf.mxu0
        %v959 = vadd.f32 0.0, %v958
        %v960 = vpop.f32.mrf.mxu0
        %v961 = vpop.f32.mrf.mxu0
        %v962 = vadd.f32 0.0, %v961
        %v963 = vpop.f32.mrf.mxu0
        %964 = vmatprep.mubr.bf16.mxu0 %v577
        %965 = vmatmul.mubr.bf16.gmra.mxu0 %v576
        %v966 = vpop.f32.mrf.mxu0
        %v967 = vadd.f32 0.0, %v966
        %v968 = vpop.f32.mrf.mxu0
        %v969 = vpop.f32.mrf.mxu0
        %v970 = vadd.f32 0.0, %v969
        %v971 = vpop.f32.mrf.mxu0
        %972 = vmatprep.mubr.bf16.mxu0 %v581
        %973 = vmatmul.mubr.bf16.gmra.mxu0 %v580
        %v974 = vpop.f32.mrf.mxu0
        %v975 = vadd.f32 0.0, %v974
        %v976 = vpop.f32.mrf.mxu0
        %v977 = vpop.f32.mrf.mxu0
        %v978 = vadd.f32 0.0, %v977
        %v979 = vpop.f32.mrf.mxu0
        %980 = vmatprep.mubr.bf16.mxu0 %v585
        %981 = vmatmul.mubr.bf16.gmra.mxu0 %v584
        %v982 = vpop.f32.mrf.mxu0
        %v983 = vadd.f32 0.0, %v982
        %v984 = vpop.f32.mrf.mxu0
        %v985 = vpop.f32.mrf.mxu0
        %v986 = vadd.f32 0.0, %v985
        %v987 = vpop.f32.mrf.mxu0
        %988 = vmatprep.mubr.bf16.mxu0 %v589
        %989 = vmatmul.mubr.bf16.gmra.mxu0 %v588
        %v990 = vpop.f32.mrf.mxu0
        %v991 = vadd.f32 0.0, %v990
        %v992 = vpop.f32.mrf.mxu0
        %v993 = vpop.f32.mrf.mxu0
        %v994 = vadd.f32 0.0, %v993
        %v995 = vpop.f32.mrf.mxu0
        %996 = vmatprep.mubr.bf16.mxu0 %v593
        %997 = vmatmul.mubr.bf16.gmra.mxu0 %v592
        %v998 = vpop.f32.mrf.mxu0
        %v999 = vadd.f32 0.0, %v998
        %v1000 = vpop.f32.mrf.mxu0
        %v1001 = vpop.f32.mrf.mxu0
        %v1002 = vadd.f32 0.0, %v1001
        %v1003 = vpop.f32.mrf.mxu0
        %1004 = vmatprep.mubr.bf16.mxu0 %v597
        %1005 = vmatmul.mubr.bf16.gmra.mxu0 %v596
        %v1006 = vpop.f32.mrf.mxu0
        %v1007 = vadd.f32 0.0, %v1006
        %v1008 = vpop.f32.mrf.mxu0
        %v1009 = vpop.f32.mrf.mxu0
        %v1010 = vadd.f32 0.0, %v1009
        %v1011 = vpop.f32.mrf.mxu0
        %1012 = vmatprep.mubr.bf16.mxu0 %v601
        %1013 = vmatmul.mubr.bf16.gmra.mxu0 %v600
        %v1014 = vpop.f32.mrf.mxu0
        %v1015 = vadd.f32 0.0, %v1014
        %v1016 = vpop.f32.mrf.mxu0
        %v1017 = vpop.f32.mrf.mxu0
        %v1018 = vadd.f32 0.0, %v1017
        %v1019 = vpop.f32.mrf.mxu0
        %1020 = vdwg.mxu0
        %1021 = vmatprep.subr.bf16.mxu0 0
        %1022 = vmatpush1.bf16.msra.mxu0 %v883
        %1023 = vmatprep.subr.bf16.mxu0 0
        %1024 = vmatpush1.bf16.msra.mxu0 %v882
        %1025 = vmatprep.subr.bf16.mxu0 0
        %1026 = vmatpush1.bf16.msra.mxu0 %v881
        %1027 = vmatprep.subr.bf16.mxu0 0
        %1028 = vmatpush1.bf16.msra.mxu0 %v880
        %1029 = vmatprep.subr.bf16.mxu0 0
        %1030 = vmatpush1.bf16.msra.mxu0 %v879
        %1031 = vmatprep.subr.bf16.mxu0 0
        %1032 = vmatpush1.bf16.msra.mxu0 %v878
        %1033 = vmatprep.subr.bf16.mxu0 0
        %1034 = vmatpush1.bf16.msra.mxu0 %v877
        %1035 = vmatprep.subr.bf16.mxu0 0
        %1036 = vmatpush1.bf16.msra.mxu0 %v876
        %1037 = vmatprep.subr.bf16.mxu0 0
        %1038 = vmatpush2.bf16.msra.mxu0 %v891
        %1039 = vmatprep.subr.bf16.mxu0 0
        %1040 = vmatpush2.bf16.msra.mxu0 %v890
        %1041 = vmatprep.subr.bf16.mxu0 0
        %1042 = vmatpush2.bf16.msra.mxu0 %v889
        %1043 = vmatprep.subr.bf16.mxu0 0
        %1044 = vmatpush2.bf16.msra.mxu0 %v888
        %1045 = vmatprep.subr.bf16.mxu0 0
        %1046 = vmatpush2.bf16.msra.mxu0 %v887
        %1047 = vmatprep.subr.bf16.mxu0 0
        %1048 = vmatpush2.bf16.msra.mxu0 %v886
        %1049 = vmatprep.subr.bf16.mxu0 0
        %1050 = vmatpush2.bf16.msra.mxu0 %v885
        %1051 = vmatprep.subr.bf16.mxu0 0
        %1052 = vmatpush2.bf16.msra.mxu0 %v884
        %1053 = vmatprep.mubr.bf16.mxu0 %v575
        %1054 = vmatmul.mubr.bf16.gmra.mxu0 %v574
        %v1055 = vpop.f32.mrf.mxu0
        %v1056 = vadd.f32 %v959, %v1055
        %v1057 = vpop.f32.mrf.mxu0
        %v1058 = vpop.f32.mrf.mxu0
        %v1059 = vadd.f32 %v962, %v1058
        %v1060 = vpop.f32.mrf.mxu0
        %1061 = vmatprep.mubr.bf16.mxu0 %v579
        %1062 = vmatmul.mubr.bf16.gmra.mxu0 %v578
        %v1063 = vpop.f32.mrf.mxu0
        %v1064 = vadd.f32 %v967, %v1063
        %v1065 = vpop.f32.mrf.mxu0
        %v1066 = vpop.f32.mrf.mxu0
        %v1067 = vadd.f32 %v970, %v1066
        %v1068 = vpop.f32.mrf.mxu0
        %1069 = vmatprep.mubr.bf16.mxu0 %v583
        %1070 = vmatmul.mubr.bf16.gmra.mxu0 %v582
        %v1071 = vpop.f32.mrf.mxu0
        %v1072 = vadd.f32 %v975, %v1071
        %v1073 = vpop.f32.mrf.mxu0
        %v1074 = vpop.f32.mrf.mxu0
        %v1075 = vadd.f32 %v978, %v1074
        %v1076 = vpop.f32.mrf.mxu0
        %1077 = vmatprep.mubr.bf16.mxu0 %v587
        %1078 = vmatmul.mubr.bf16.gmra.mxu0 %v586
        %v1079 = vpop.f32.mrf.mxu0
        %v1080 = vadd.f32 %v983, %v1079
        %v1081 = vpop.f32.mrf.mxu0
        %v1082 = vpop.f32.mrf.mxu0
        %v1083 = vadd.f32 %v986, %v1082
        %v1084 = vpop.f32.mrf.mxu0
        %1085 = vmatprep.mubr.bf16.mxu0 %v591
        %1086 = vmatmul.mubr.bf16.gmra.mxu0 %v590
        %v1087 = vpop.f32.mrf.mxu0
        %v1088 = vadd.f32 %v991, %v1087
        %v1089 = vpop.f32.mrf.mxu0
        %v1090 = vpop.f32.mrf.mxu0
        %v1091 = vadd.f32 %v994, %v1090
        %v1092 = vpop.f32.mrf.mxu0
        %1093 = vmatprep.mubr.bf16.mxu0 %v595
        %1094 = vmatmul.mubr.bf16.gmra.mxu0 %v594
        %v1095 = vpop.f32.mrf.mxu0
        %v1096 = vadd.f32 %v999, %v1095
        %v1097 = vpop.f32.mrf.mxu0
        %v1098 = vpop.f32.mrf.mxu0
        %v1099 = vadd.f32 %v1002, %v1098
        %v1100 = vpop.f32.mrf.mxu0
        %1101 = vmatprep.mubr.bf16.mxu0 %v599
        %1102 = vmatmul.mubr.bf16.gmra.mxu0 %v598
        %v1103 = vpop.f32.mrf.mxu0
        %v1104 = vadd.f32 %v1007, %v1103
        %v1105 = vpop.f32.mrf.mxu0
        %v1106 = vpop.f32.mrf.mxu0
        %v1107 = vadd.f32 %v1010, %v1106
        %v1108 = vpop.f32.mrf.mxu0
        %1109 = vmatprep.mubr.bf16.mxu0 %v603
        %1110 = vmatmul.mubr.bf16.gmra.mxu0 %v602
        %v1111 = vpop.f32.mrf.mxu0
        %v1112 = vadd.f32 %v1015, %v1111
        %v1113 = vpop.f32.mrf.mxu0
        %v1114 = vpop.f32.mrf.mxu0
        %v1115 = vadd.f32 %v1018, %v1114
        %v1116 = vpop.f32.mrf.mxu0
        %1117 = vdwg.mxu0
        %v1182 = vunpack.c.l.b16 %v604
        %v1183 = vunpack.c.l.b16 %v605
        %v1184 = vunpack.c.l.b16 %v606
        %v1185 = vunpack.c.l.b16 %v607
        %v1186 = vunpack.c.l.b16 %v608
        %v1187 = vunpack.c.l.b16 %v609
        %v1188 = vunpack.c.l.b16 %v610
        %v1189 = vunpack.c.l.b16 %v611
        %v1190 = vunpack.c.l.b16 %v612
        %v1191 = vunpack.c.l.b16 %v613
        %v1192 = vunpack.c.l.b16 %v614
        %v1193 = vunpack.c.l.b16 %v615
        %v1194 = vunpack.c.l.b16 %v616
        %v1195 = vunpack.c.l.b16 %v617
        %v1196 = vunpack.c.l.b16 %v618
        %v1197 = vunpack.c.l.b16 %v619
        %v1198 = vunpack.c.l.b16 %v620
        %v1199 = vunpack.c.l.b16 %v621
        %v1200 = vunpack.c.l.b16 %v622
        %v1201 = vunpack.c.l.b16 %v623
        %v1202 = vunpack.c.l.b16 %v624
        %v1203 = vunpack.c.l.b16 %v625
        %v1204 = vunpack.c.l.b16 %v626
        %v1205 = vunpack.c.l.b16 %v627
        %v1206 = vunpack.c.l.b16 %v628
        %v1207 = vunpack.c.l.b16 %v629
        %v1208 = vunpack.c.l.b16 %v630
        %v1209 = vunpack.c.l.b16 %v631
        %v1210 = vunpack.c.l.b16 %v632
        %v1211 = vunpack.c.l.b16 %v633
        %v1212 = vunpack.c.l.b16 %v634
        %v1213 = vunpack.c.l.b16 %v635
        %v1214 = vunpack.c.l.b16 %v636
        %v1215 = vunpack.c.l.b16 %v637
        %v1216 = vunpack.c.l.b16 %v638
        %v1217 = vunpack.c.l.b16 %v639
        %v1218 = vunpack.c.l.b16 %v640
        %v1219 = vunpack.c.l.b16 %v641
        %v1220 = vunpack.c.l.b16 %v642
        %v1221 = vunpack.c.l.b16 %v643
        %v1222 = vunpack.c.l.b16 %v644
        %v1223 = vunpack.c.l.b16 %v645
        %v1224 = vunpack.c.l.b16 %v646
        %v1225 = vunpack.c.l.b16 %v647
        %v1226 = vunpack.c.l.b16 %v648
        %v1227 = vunpack.c.l.b16 %v649
        %v1228 = vunpack.c.l.b16 %v650
        %v1229 = vunpack.c.l.b16 %v651
        %v1230 = vunpack.c.l.b16 %v652
        %v1231 = vunpack.c.l.b16 %v653
        %v1232 = vunpack.c.l.b16 %v654
        %v1233 = vunpack.c.l.b16 %v655
        %v1234 = vunpack.c.l.b16 %v656
        %v1235 = vunpack.c.l.b16 %v657
        %v1236 = vunpack.c.l.b16 %v658
        %v1237 = vunpack.c.l.b16 %v659
        %v1238 = vunpack.c.l.b16 %v660
        %v1239 = vunpack.c.l.b16 %v661
        %v1240 = vunpack.c.l.b16 %v662
        %v1241 = vunpack.c.l.b16 %v663
        %v1242 = vunpack.c.l.b16 %v664
        %v1243 = vunpack.c.l.b16 %v665
        %v1244 = vunpack.c.l.b16 %v666
        %v1245 = vunpack.c.l.b16 %v667
        %v1246 = vpack.c.b16 %v1183, %v1182
        %v1247 = vpack.c.b16 %v1185, %v1184
        %v1248 = vpack.c.b16 %v1187, %v1186
        %v1249 = vpack.c.b16 %v1189, %v1188
        %v1250 = vpack.c.b16 %v1191, %v1190
        %v1251 = vpack.c.b16 %v1193, %v1192
        %v1252 = vpack.c.b16 %v1195, %v1194
        %v1253 = vpack.c.b16 %v1197, %v1196
        %v1254 = vpack.c.b16 %v1199, %v1198
        %v1255 = vpack.c.b16 %v1201, %v1200
        %v1256 = vpack.c.b16 %v1203, %v1202
        %v1257 = vpack.c.b16 %v1205, %v1204
        %v1258 = vpack.c.b16 %v1207, %v1206
        %v1259 = vpack.c.b16 %v1209, %v1208
        %v1260 = vpack.c.b16 %v1211, %v1210
        %v1261 = vpack.c.b16 %v1213, %v1212
        %v1262 = vpack.c.b16 %v1215, %v1214
        %v1263 = vpack.c.b16 %v1217, %v1216
        %v1264 = vpack.c.b16 %v1219, %v1218
        %v1265 = vpack.c.b16 %v1221, %v1220
        %v1266 = vpack.c.b16 %v1223, %v1222
        %v1267 = vpack.c.b16 %v1225, %v1224
        %v1268 = vpack.c.b16 %v1227, %v1226
        %v1269 = vpack.c.b16 %v1229, %v1228
        %v1270 = vpack.c.b16 %v1231, %v1230
        %v1271 = vpack.c.b16 %v1233, %v1232
        %v1272 = vpack.c.b16 %v1235, %v1234
        %v1273 = vpack.c.b16 %v1237, %v1236
        %v1274 = vpack.c.b16 %v1239, %v1238
        %v1275 = vpack.c.b16 %v1241, %v1240
        %v1276 = vpack.c.b16 %v1243, %v1242
        %v1277 = vpack.c.b16 %v1245, %v1244
        %1310 = vmatprep.subr.bf16.mxu0 0
        %1311 = vmatpush1.bf16.msra.mxu0 %v1253
        %1312 = vmatprep.subr.bf16.mxu0 0
        %1313 = vmatpush1.bf16.msra.mxu0 %v1252
        %1314 = vmatprep.subr.bf16.mxu0 0
        %1315 = vmatpush1.bf16.msra.mxu0 %v1251
        %1316 = vmatprep.subr.bf16.mxu0 0
        %1317 = vmatpush1.bf16.msra.mxu0 %v1250
        %1318 = vmatprep.subr.bf16.mxu0 0
        %1319 = vmatpush1.bf16.msra.mxu0 %v1249
        %1320 = vmatprep.subr.bf16.mxu0 0
        %1321 = vmatpush1.bf16.msra.mxu0 %v1248
        %1322 = vmatprep.subr.bf16.mxu0 0
        %1323 = vmatpush1.bf16.msra.mxu0 %v1247
        %1324 = vmatprep.subr.bf16.mxu0 0
        %1325 = vmatpush1.bf16.msra.mxu0 %v1246
        %1326 = vmatprep.subr.bf16.mxu0 0
        %1327 = vmatpush2.bf16.msra.mxu0 %v1261
        %1328 = vmatprep.subr.bf16.mxu0 0
        %1329 = vmatpush2.bf16.msra.mxu0 %v1260
        %1330 = vmatprep.subr.bf16.mxu0 0
        %1331 = vmatpush2.bf16.msra.mxu0 %v1259
        %1332 = vmatprep.subr.bf16.mxu0 0
        %1333 = vmatpush2.bf16.msra.mxu0 %v1258
        %1334 = vmatprep.subr.bf16.mxu0 0
        %1335 = vmatpush2.bf16.msra.mxu0 %v1257
        %1336 = vmatprep.subr.bf16.mxu0 0
        %1337 = vmatpush2.bf16.msra.mxu0 %v1256
        %1338 = vmatprep.subr.bf16.mxu0 0
        %1339 = vmatpush2.bf16.msra.mxu0 %v1255
        %1340 = vmatprep.subr.bf16.mxu0 0
        %1341 = vmatpush2.bf16.msra.mxu0 %v1254
        %1342 = vmatprep.mubr.bf16.mxu0 %v573
        %1343 = vmatmul.mubr.bf16.gmra.mxu0 %v572
        %v1344 = vpop.f32.mrf.mxu0
        %v1345 = vadd.f32 %v1056, %v1344
        %v1346 = vpop.f32.mrf.mxu0
        %v1347 = vpop.f32.mrf.mxu0
        %v1348 = vadd.f32 %v1059, %v1347
        %v1349 = vpop.f32.mrf.mxu0
        %1350 = vmatprep.mubr.bf16.mxu0 %v577
        %1351 = vmatmul.mubr.bf16.gmra.mxu0 %v576
        %v1352 = vpop.f32.mrf.mxu0
        %v1353 = vadd.f32 %v1064, %v1352
        %v1354 = vpop.f32.mrf.mxu0
        %v1355 = vpop.f32.mrf.mxu0
        %v1356 = vadd.f32 %v1067, %v1355
        %v1357 = vpop.f32.mrf.mxu0
        %1358 = vmatprep.mubr.bf16.mxu0 %v581
        %1359 = vmatmul.mubr.bf16.gmra.mxu0 %v580
        %v1360 = vpop.f32.mrf.mxu0
        %v1361 = vadd.f32 %v1072, %v1360
        %v1362 = vpop.f32.mrf.mxu0
        %v1363 = vpop.f32.mrf.mxu0
        %v1364 = vadd.f32 %v1075, %v1363
        %v1365 = vpop.f32.mrf.mxu0
        %1366 = vmatprep.mubr.bf16.mxu0 %v585
        %1367 = vmatmul.mubr.bf16.gmra.mxu0 %v584
        %v1368 = vpop.f32.mrf.mxu0
        %v1369 = vadd.f32 %v1080, %v1368
        %v1370 = vpop.f32.mrf.mxu0
        %v1371 = vpop.f32.mrf.mxu0
        %v1372 = vadd.f32 %v1083, %v1371
        %v1373 = vpop.f32.mrf.mxu0
        %1374 = vmatprep.mubr.bf16.mxu0 %v589
        %1375 = vmatmul.mubr.bf16.gmra.mxu0 %v588
        %v1376 = vpop.f32.mrf.mxu0
        %v1377 = vadd.f32 %v1088, %v1376
        %v1378 = vpop.f32.mrf.mxu0
        %v1379 = vpop.f32.mrf.mxu0
        %v1380 = vadd.f32 %v1091, %v1379
        %v1381 = vpop.f32.mrf.mxu0
        %1382 = vmatprep.mubr.bf16.mxu0 %v593
        %1383 = vmatmul.mubr.bf16.gmra.mxu0 %v592
        %v1384 = vpop.f32.mrf.mxu0
        %v1385 = vadd.f32 %v1096, %v1384
        %v1386 = vpop.f32.mrf.mxu0
        %v1387 = vpop.f32.mrf.mxu0
        %v1388 = vadd.f32 %v1099, %v1387
        %v1389 = vpop.f32.mrf.mxu0
        %1390 = vmatprep.mubr.bf16.mxu0 %v597
        %1391 = vmatmul.mubr.bf16.gmra.mxu0 %v596
        %v1392 = vpop.f32.mrf.mxu0
        %v1393 = vadd.f32 %v1104, %v1392
        %v1394 = vpop.f32.mrf.mxu0
        %v1395 = vpop.f32.mrf.mxu0
        %v1396 = vadd.f32 %v1107, %v1395
        %v1397 = vpop.f32.mrf.mxu0
        %1398 = vmatprep.mubr.bf16.mxu0 %v601
        %1399 = vmatmul.mubr.bf16.gmra.mxu0 %v600
        %v1400 = vpop.f32.mrf.mxu0
        %v1401 = vadd.f32 %v1112, %v1400
        %v1402 = vpop.f32.mrf.mxu0
        %v1403 = vpop.f32.mrf.mxu0
        %v1404 = vadd.f32 %v1115, %v1403
        %v1405 = vpop.f32.mrf.mxu0
        %1406 = vdwg.mxu0
        %1407 = vmatprep.subr.bf16.mxu0 0
        %1408 = vmatpush1.bf16.msra.mxu0 %v1269
        %1409 = vmatprep.subr.bf16.mxu0 0
        %1410 = vmatpush1.bf16.msra.mxu0 %v1268
        %1411 = vmatprep.subr.bf16.mxu0 0
        %1412 = vmatpush1.bf16.msra.mxu0 %v1267
        %1413 = vmatprep.subr.bf16.mxu0 0
        %1414 = vmatpush1.bf16.msra.mxu0 %v1266
        %1415 = vmatprep.subr.bf16.mxu0 0
        %1416 = vmatpush1.bf16.msra.mxu0 %v1265
        %1417 = vmatprep.subr.bf16.mxu0 0
        %1418 = vmatpush1.bf16.msra.mxu0 %v1264
        %1419 = vmatprep.subr.bf16.mxu0 0
        %1420 = vmatpush1.bf16.msra.mxu0 %v1263
        %1421 = vmatprep.subr.bf16.mxu0 0
        %1422 = vmatpush1.bf16.msra.mxu0 %v1262
        %1423 = vmatprep.subr.bf16.mxu0 0
        %1424 = vmatpush2.bf16.msra.mxu0 %v1277
        %1425 = vmatprep.subr.bf16.mxu0 0
        %1426 = vmatpush2.bf16.msra.mxu0 %v1276
        %1427 = vmatprep.subr.bf16.mxu0 0
        %1428 = vmatpush2.bf16.msra.mxu0 %v1275
        %1429 = vmatprep.subr.bf16.mxu0 0
        %1430 = vmatpush2.bf16.msra.mxu0 %v1274
        %1431 = vmatprep.subr.bf16.mxu0 0
        %1432 = vmatpush2.bf16.msra.mxu0 %v1273
        %1433 = vmatprep.subr.bf16.mxu0 0
        %1434 = vmatpush2.bf16.msra.mxu0 %v1272
        %1435 = vmatprep.subr.bf16.mxu0 0
        %1436 = vmatpush2.bf16.msra.mxu0 %v1271
        %1437 = vmatprep.subr.bf16.mxu0 0
        %1438 = vmatpush2.bf16.msra.mxu0 %v1270
        %1439 = vmatprep.mubr.bf16.mxu0 %v575
        %1440 = vmatmul.mubr.bf16.gmra.mxu0 %v574
        %v1441 = vpop.f32.mrf.mxu0
        %v1442 = vadd.f32 %v1345, %v1441
        %v1443 = vpop.f32.mrf.mxu0
        %v1444 = vpop.f32.mrf.mxu0
        %v1445 = vadd.f32 %v1348, %v1444
        %v1446 = vpop.f32.mrf.mxu0
        %1447 = vmatprep.mubr.bf16.mxu0 %v579
        %1448 = vmatmul.mubr.bf16.gmra.mxu0 %v578
        %v1449 = vpop.f32.mrf.mxu0
        %v1450 = vadd.f32 %v1353, %v1449
        %v1451 = vpop.f32.mrf.mxu0
        %v1452 = vpop.f32.mrf.mxu0
        %v1453 = vadd.f32 %v1356, %v1452
        %v1454 = vpop.f32.mrf.mxu0
        %1455 = vmatprep.mubr.bf16.mxu0 %v583
        %1456 = vmatmul.mubr.bf16.gmra.mxu0 %v582
        %v1457 = vpop.f32.mrf.mxu0
        %v1458 = vadd.f32 %v1361, %v1457
        %v1459 = vpop.f32.mrf.mxu0
        %v1460 = vpop.f32.mrf.mxu0
        %v1461 = vadd.f32 %v1364, %v1460
        %v1462 = vpop.f32.mrf.mxu0
        %1463 = vmatprep.mubr.bf16.mxu0 %v587
        %1464 = vmatmul.mubr.bf16.gmra.mxu0 %v586
        %v1465 = vpop.f32.mrf.mxu0
        %v1466 = vadd.f32 %v1369, %v1465
        %v1467 = vpop.f32.mrf.mxu0
        %v1468 = vpop.f32.mrf.mxu0
        %v1469 = vadd.f32 %v1372, %v1468
        %v1470 = vpop.f32.mrf.mxu0
        %1471 = vmatprep.mubr.bf16.mxu0 %v591
        %1472 = vmatmul.mubr.bf16.gmra.mxu0 %v590
        %v1473 = vpop.f32.mrf.mxu0
        %v1474 = vadd.f32 %v1377, %v1473
        %v1475 = vpop.f32.mrf.mxu0
        %v1476 = vpop.f32.mrf.mxu0
        %v1477 = vadd.f32 %v1380, %v1476
        %v1478 = vpop.f32.mrf.mxu0
        %1479 = vmatprep.mubr.bf16.mxu0 %v595
        %1480 = vmatmul.mubr.bf16.gmra.mxu0 %v594
        %v1481 = vpop.f32.mrf.mxu0
        %v1482 = vadd.f32 %v1385, %v1481
        %v1483 = vpop.f32.mrf.mxu0
        %v1484 = vpop.f32.mrf.mxu0
        %v1485 = vadd.f32 %v1388, %v1484
        %v1486 = vpop.f32.mrf.mxu0
        %1487 = vmatprep.mubr.bf16.mxu0 %v599
        %1488 = vmatmul.mubr.bf16.gmra.mxu0 %v598
        %v1489 = vpop.f32.mrf.mxu0
        %v1490 = vadd.f32 %v1393, %v1489
        %v1491 = vpop.f32.mrf.mxu0
        %v1492 = vpop.f32.mrf.mxu0
        %v1493 = vadd.f32 %v1396, %v1492
        %v1494 = vpop.f32.mrf.mxu0
        %1495 = vmatprep.mubr.bf16.mxu0 %v603
        %1496 = vmatmul.mubr.bf16.gmra.mxu0 %v602
        %v1497 = vpop.f32.mrf.mxu0
        %v1498 = vadd.f32 %v1401, %v1497
        %v1499 = vpop.f32.mrf.mxu0
        %v1500 = vpop.f32.mrf.mxu0
        %v1501 = vadd.f32 %v1404, %v1500
        %v1502 = vpop.f32.mrf.mxu0
        %1503 = vdwg.mxu0
        %v1504 = vld [vmem:[#allocation2] sm:$0xff]
        %v1505 = vld [vmem:[#allocation2 + $0x8] sm:$0xff]
        %v1506 = vld [vmem:[#allocation2 + $0x10] sm:$0xff]
        %v1507 = vld [vmem:[#allocation2 + $0x18] sm:$0xff]
        %v1508 = vld [vmem:[#allocation2 + $0x20] sm:$0xff]
        %v1509 = vld [vmem:[#allocation2 + $0x28] sm:$0xff]
        %v1510 = vld [vmem:[#allocation2 + $0x30] sm:$0xff]
        %v1511 = vld [vmem:[#allocation2 + $0x38] sm:$0xff]
        %v1512 = vld [vmem:[#allocation2 + $0x40] sm:$0xff]
        %v1513 = vld [vmem:[#allocation2 + $0x48] sm:$0xff]
        %v1514 = vld [vmem:[#allocation2 + $0x50] sm:$0xff]
        %v1515 = vld [vmem:[#allocation2 + $0x58] sm:$0xff]
        %v1516 = vld [vmem:[#allocation2 + $0x60] sm:$0xff]
        %v1517 = vld [vmem:[#allocation2 + $0x68] sm:$0xff]
        %v1518 = vld [vmem:[#allocation2 + $0x70] sm:$0xff]
        %v1519 = vld [vmem:[#allocation2 + $0x78] sm:$0xff]
        %v1520 = vadd.f32 %v1442, %v1504
        %v1521 = vadd.f32 %v1445, %v1505
        %v1522 = vadd.f32 %v1450, %v1506
        %v1523 = vadd.f32 %v1453, %v1507
        %v1524 = vadd.f32 %v1458, %v1508
        %v1525 = vadd.f32 %v1461, %v1509
        %v1526 = vadd.f32 %v1466, %v1510
        %v1527 = vadd.f32 %v1469, %v1511
        %v1528 = vadd.f32 %v1474, %v1512
        %v1529 = vadd.f32 %v1477, %v1513
        %v1530 = vadd.f32 %v1482, %v1514
        %v1531 = vadd.f32 %v1485, %v1515
        %v1532 = vadd.f32 %v1490, %v1516
        %v1533 = vadd.f32 %v1493, %v1517
        %v1534 = vadd.f32 %v1498, %v1518
        %v1535 = vadd.f32 %v1501, %v1519
        %v1536 = vld [vmem:[%s4] sm:$0x3]
        %vm1537 = vcmp.gt.s32.totalorder %v311, 0
        %vm1538 = vcmp.gt.s32.totalorder %v312, 0
        %vm1539 = vcmp.gt.s32.totalorder %v313, 0
        %vm1540 = vcmp.gt.s32.totalorder %v314, 0
        %vm1541 = vcmp.gt.s32.totalorder %v315, 0
        %vm1542 = vcmp.gt.s32.totalorder %v316, 0
        %vm1543 = vcmp.gt.s32.totalorder %v317, 0
        %vm1544 = vcmp.gt.s32.totalorder %v318, 0
        %vm1545 = vcmp.gt.s32.totalorder %v319, 0
        %vm1546 = vcmp.gt.s32.totalorder %v320, 0
        %vm1547 = vcmp.gt.s32.totalorder %v321, 0
        %vm1548 = vcmp.gt.s32.totalorder %v322, 0
        %vm1549 = vcmp.gt.s32.totalorder %v323, 0
        %vm1550 = vcmp.gt.s32.totalorder %v324, 0
        %vm1551 = vcmp.gt.s32.totalorder %v325, 0
        %vm1552 = vcmp.gt.s32.totalorder %v326, 0
        %v1553 = vsel %vm1537, 1, 0
        %v1554 = vsel %vm1538, 1, 0
        %v1555 = vsel %vm1539, 1, 0
        %v1556 = vsel %vm1540, 1, 0
        %v1557 = vsel %vm1541, 1, 0
        %v1558 = vsel %vm1542, 1, 0
        %v1559 = vsel %vm1543, 1, 0
        %v1560 = vsel %vm1544, 1, 0
        %v1561 = vsel %vm1545, 1, 0
        %v1562 = vsel %vm1546, 1, 0
        %v1563 = vsel %vm1547, 1, 0
        %v1564 = vsel %vm1548, 1, 0
        %v1565 = vsel %vm1549, 1, 0
        %v1566 = vsel %vm1550, 1, 0
        %v1567 = vsel %vm1551, 1, 0
        %v1568 = vsel %vm1552, 1, 0
        %1569 = vset.pattern.permute.xlu0 1
        %1570 = vperm.xlu0 %1569, %v1553
        %v1571 = vpop.permute.xlu0 %1570
        %1572 = vset.pattern.permute.xlu0 1
        %1573 = vperm.xlu0 %1572, %v1554
        %v1574 = vpop.permute.xlu0 %1573
        %1575 = vset.pattern.permute.xlu0 1
        %1576 = vperm.xlu0 %1575, %v1555
        %v1577 = vpop.permute.xlu0 %1576
        %1578 = vset.pattern.permute.xlu0 1
        %1579 = vperm.xlu0 %1578, %v1556
        %v1580 = vpop.permute.xlu0 %1579
        %1581 = vset.pattern.permute.xlu0 1
        %1582 = vperm.xlu0 %1581, %v1557
        %v1583 = vpop.permute.xlu0 %1582
        %1584 = vset.pattern.permute.xlu0 1
        %1585 = vperm.xlu0 %1584, %v1558
        %v1586 = vpop.permute.xlu0 %1585
        %1587 = vset.pattern.permute.xlu0 1
        %1588 = vperm.xlu0 %1587, %v1559
        %v1589 = vpop.permute.xlu0 %1588
        %1590 = vset.pattern.permute.xlu0 1
        %1591 = vperm.xlu0 %1590, %v1560
        %v1592 = vpop.permute.xlu0 %1591
        %1593 = vset.pattern.permute.xlu0 1
        %1594 = vperm.xlu0 %1593, %v1561
        %v1595 = vpop.permute.xlu0 %1594
        %1596 = vset.pattern.permute.xlu0 1
        %1597 = vperm.xlu0 %1596, %v1562
        %v1598 = vpop.permute.xlu0 %1597
        %1599 = vset.pattern.permute.xlu0 1
        %1600 = vperm.xlu0 %1599, %v1563
        %v1601 = vpop.permute.xlu0 %1600
        %1602 = vset.pattern.permute.xlu0 1
        %1603 = vperm.xlu0 %1602, %v1564
        %v1604 = vpop.permute.xlu0 %1603
        %1605 = vset.pattern.permute.xlu0 1
        %1606 = vperm.xlu0 %1605, %v1565
        %v1607 = vpop.permute.xlu0 %1606
        %1608 = vset.pattern.permute.xlu0 1
        %1609 = vperm.xlu0 %1608, %v1566
        %v1610 = vpop.permute.xlu0 %1609
        %1611 = vset.pattern.permute.xlu0 1
        %1612 = vperm.xlu0 %1611, %v1567
        %v1613 = vpop.permute.xlu0 %1612
        %1614 = vset.pattern.permute.xlu0 1
        %1615 = vperm.xlu0 %1614, %v1568
        %v1616 = vpop.permute.xlu0 %1615
        %vm1617 = vcmp.eq.s32.totalorder %v1571, 1
        %vm1618 = vcmp.eq.s32.totalorder %v1574, 1
        %vm1619 = vcmp.eq.s32.totalorder %v1577, 1
        %vm1620 = vcmp.eq.s32.totalorder %v1580, 1
        %vm1621 = vcmp.eq.s32.totalorder %v1583, 1
        %vm1622 = vcmp.eq.s32.totalorder %v1586, 1
        %vm1623 = vcmp.eq.s32.totalorder %v1589, 1
        %vm1624 = vcmp.eq.s32.totalorder %v1592, 1
        %vm1625 = vcmp.eq.s32.totalorder %v1595, 1
        %vm1626 = vcmp.eq.s32.totalorder %v1598, 1
        %vm1627 = vcmp.eq.s32.totalorder %v1601, 1
        %vm1628 = vcmp.eq.s32.totalorder %v1604, 1
        %vm1629 = vcmp.eq.s32.totalorder %v1607, 1
        %vm1630 = vcmp.eq.s32.totalorder %v1610, 1
        %vm1631 = vcmp.eq.s32.totalorder %v1613, 1
        %vm1632 = vcmp.eq.s32.totalorder %v1616, 1
        %v1633 = vlaneseq
        %v1634 = vshrl.u32 %v1633, 7
        %v1635 = vsub.s32 1, %v1634
        %v1636 = vrot.slane %v1536, %v1635
        %v1637 = vlaneseq
        %v1638 = vshrl.u32 %v1637, 7
        %v1639 = vsub.s32 0, %v1638
        %v1640 = vrot.slane %v1536, %v1639
        %v1641 = vsel %vm1617, %v1636, %v1640
        %v1642 = vsel %vm1618, %v1636, %v1640
        %v1643 = vsel %vm1619, %v1636, %v1640
        %v1644 = vsel %vm1620, %v1636, %v1640
        %v1645 = vsel %vm1621, %v1636, %v1640
        %v1646 = vsel %vm1622, %v1636, %v1640
        %v1647 = vsel %vm1623, %v1636, %v1640
        %v1648 = vsel %vm1624, %v1636, %v1640
        %v1649 = vsel %vm1625, %v1636, %v1640
        %v1650 = vsel %vm1626, %v1636, %v1640
        %v1651 = vsel %vm1627, %v1636, %v1640
        %v1652 = vsel %vm1628, %v1636, %v1640
        %v1653 = vsel %vm1629, %v1636, %v1640
        %v1654 = vsel %vm1630, %v1636, %v1640
        %v1655 = vsel %vm1631, %v1636, %v1640
        %v1656 = vsel %vm1632, %v1636, %v1640
        %v1657 = vadd.f32 %v1520, %v1641
        %v1658 = vadd.f32 %v1521, %v1642
        %v1659 = vadd.f32 %v1522, %v1643
        %v1660 = vadd.f32 %v1523, %v1644
        %v1661 = vadd.f32 %v1524, %v1645
        %v1662 = vadd.f32 %v1525, %v1646
        %v1663 = vadd.f32 %v1526, %v1647
        %v1664 = vadd.f32 %v1527, %v1648
        %v1665 = vadd.f32 %v1528, %v1649
        %v1666 = vadd.f32 %v1529, %v1650
        %v1667 = vadd.f32 %v1530, %v1651
        %v1668 = vadd.f32 %v1531, %v1652
        %v1669 = vadd.f32 %v1532, %v1653
        %v1670 = vadd.f32 %v1533, %v1654
        %v1671 = vadd.f32 %v1534, %v1655
        %v1672 = vadd.f32 %v1535, %v1656
        %1673 = vadd.xlane.f32.xlu0 %v1657
        %v1674 = vpop.xlane.xlu0 %1673
        %1675 = vadd.xlane.f32.xlu0 %v1658
        %v1676 = vpop.xlane.xlu0 %1675
        %1677 = vadd.xlane.f32.xlu0 %v1659
        %v1678 = vpop.xlane.xlu0 %1677
        %1679 = vadd.xlane.f32.xlu0 %v1660
        %v1680 = vpop.xlane.xlu0 %1679
        %1681 = vadd.xlane.f32.xlu0 %v1661
        %v1682 = vpop.xlane.xlu0 %1681
        %1683 = vadd.xlane.f32.xlu0 %v1662
        %v1684 = vpop.xlane.xlu0 %1683
        %1685 = vadd.xlane.f32.xlu0 %v1663
        %v1686 = vpop.xlane.xlu0 %1685
        %1687 = vadd.xlane.f32.xlu0 %v1664
        %v1688 = vpop.xlane.xlu0 %1687
        %1689 = vadd.xlane.f32.xlu0 %v1665
        %v1690 = vpop.xlane.xlu0 %1689
        %1691 = vadd.xlane.f32.xlu0 %v1666
        %v1692 = vpop.xlane.xlu0 %1691
        %1693 = vadd.xlane.f32.xlu0 %v1667
        %v1694 = vpop.xlane.xlu0 %1693
        %1695 = vadd.xlane.f32.xlu0 %v1668
        %v1696 = vpop.xlane.xlu0 %1695
        %1697 = vadd.xlane.f32.xlu0 %v1669
        %v1698 = vpop.xlane.xlu0 %1697
        %1699 = vadd.xlane.f32.xlu0 %v1670
        %v1700 = vpop.xlane.xlu0 %1699
        %1701 = vadd.xlane.f32.xlu0 %v1671
        %v1702 = vpop.xlane.xlu0 %1701
        %1703 = vadd.xlane.f32.xlu0 %v1672
        %v1704 = vpop.xlane.xlu0 %1703
        %v1705 = vrcp.pop 128.0
        %v1706 = vmul.f32 %v1674, %v1705
        %v1707 = vmul.f32 %v1676, %v1705
        %v1708 = vmul.f32 %v1678, %v1705
        %v1709 = vmul.f32 %v1680, %v1705
        %v1710 = vmul.f32 %v1682, %v1705
        %v1711 = vmul.f32 %v1684, %v1705
        %v1712 = vmul.f32 %v1686, %v1705
        %v1713 = vmul.f32 %v1688, %v1705
        %v1714 = vmul.f32 %v1690, %v1705
        %v1715 = vmul.f32 %v1692, %v1705
        %v1716 = vmul.f32 %v1694, %v1705
        %v1717 = vmul.f32 %v1696, %v1705
        %v1718 = vmul.f32 %v1698, %v1705
        %v1719 = vmul.f32 %v1700, %v1705
        %v1720 = vmul.f32 %v1702, %v1705
        %v1721 = vmul.f32 %v1704, %v1705
        %v1722 = vsub.f32 %v1657, %v1706
        %v1723 = vsub.f32 %v1658, %v1707
        %v1724 = vsub.f32 %v1659, %v1708
        %v1725 = vsub.f32 %v1660, %v1709
        %v1726 = vsub.f32 %v1661, %v1710
        %v1727 = vsub.f32 %v1662, %v1711
        %v1728 = vsub.f32 %v1663, %v1712
        %v1729 = vsub.f32 %v1664, %v1713
        %v1730 = vsub.f32 %v1665, %v1714
        %v1731 = vsub.f32 %v1666, %v1715
        %v1732 = vsub.f32 %v1667, %v1716
        %v1733 = vsub.f32 %v1668, %v1717
        %v1734 = vsub.f32 %v1669, %v1718
        %v1735 = vsub.f32 %v1670, %v1719
        %v1736 = vsub.f32 %v1671, %v1720
        %v1737 = vsub.f32 %v1672, %v1721
        %v1738 = vmul.f32 %v1722, %v1722
        %v1739 = vmul.f32 %v1723, %v1723
        %v1740 = vmul.f32 %v1724, %v1724
        %v1741 = vmul.f32 %v1725, %v1725
        %v1742 = vmul.f32 %v1726, %v1726
        %v1743 = vmul.f32 %v1727, %v1727
        %v1744 = vmul.f32 %v1728, %v1728
        %v1745 = vmul.f32 %v1729, %v1729
        %v1746 = vmul.f32 %v1730, %v1730
        %v1747 = vmul.f32 %v1731, %v1731
        %v1748 = vmul.f32 %v1732, %v1732
        %v1749 = vmul.f32 %v1733, %v1733
        %v1750 = vmul.f32 %v1734, %v1734
        %v1751 = vmul.f32 %v1735, %v1735
        %v1752 = vmul.f32 %v1736, %v1736
        %v1753 = vmul.f32 %v1737, %v1737
        %1754 = vadd.xlane.f32.xlu0 %v1738
        %v1755 = vpop.xlane.xlu0 %1754
        %1756 = vadd.xlane.f32.xlu0 %v1739
        %v1757 = vpop.xlane.xlu0 %1756
        %1758 = vadd.xlane.f32.xlu0 %v1740
        %v1759 = vpop.xlane.xlu0 %1758
        %1760 = vadd.xlane.f32.xlu0 %v1741
        %v1761 = vpop.xlane.xlu0 %1760
        %1762 = vadd.xlane.f32.xlu0 %v1742
        %v1763 = vpop.xlane.xlu0 %1762
        %1764 = vadd.xlane.f32.xlu0 %v1743
        %v1765 = vpop.xlane.xlu0 %1764
        %1766 = vadd.xlane.f32.xlu0 %v1744
        %v1767 = vpop.xlane.xlu0 %1766
        %1768 = vadd.xlane.f32.xlu0 %v1745
        %v1769 = vpop.xlane.xlu0 %1768
        %1770 = vadd.xlane.f32.xlu0 %v1746
        %v1771 = vpop.xlane.xlu0 %1770
        %1772 = vadd.xlane.f32.xlu0 %v1747
        %v1773 = vpop.xlane.xlu0 %1772
        %1774 = vadd.xlane.f32.xlu0 %v1748
        %v1775 = vpop.xlane.xlu0 %1774
        %1776 = vadd.xlane.f32.xlu0 %v1749
        %v1777 = vpop.xlane.xlu0 %1776
        %1778 = vadd.xlane.f32.xlu0 %v1750
        %v1779 = vpop.xlane.xlu0 %1778
        %1780 = vadd.xlane.f32.xlu0 %v1751
        %v1781 = vpop.xlane.xlu0 %1780
        %1782 = vadd.xlane.f32.xlu0 %v1752
        %v1783 = vpop.xlane.xlu0 %1782
        %1784 = vadd.xlane.f32.xlu0 %v1753
        %v1785 = vpop.xlane.xlu0 %1784
        %v1786 = vmul.f32 %v1755, %v1705
        %v1787 = vmul.f32 %v1757, %v1705
        %v1788 = vmul.f32 %v1759, %v1705
        %v1789 = vmul.f32 %v1761, %v1705
        %v1790 = vmul.f32 %v1763, %v1705
        %v1791 = vmul.f32 %v1765, %v1705
        %v1792 = vmul.f32 %v1767, %v1705
        %v1793 = vmul.f32 %v1769, %v1705
        %v1794 = vmul.f32 %v1771, %v1705
        %v1795 = vmul.f32 %v1773, %v1705
        %v1796 = vmul.f32 %v1775, %v1705
        %v1797 = vmul.f32 %v1777, %v1705
        %v1798 = vmul.f32 %v1779, %v1705
        %v1799 = vmul.f32 %v1781, %v1705
        %v1800 = vmul.f32 %v1783, %v1705
        %v1801 = vmul.f32 %v1785, %v1705
        %v1802 = vadd.f32 %v1786, 1e-12
        %v1803 = vadd.f32 %v1787, 1e-12
        %v1804 = vadd.f32 %v1788, 1e-12
        %v1805 = vadd.f32 %v1789, 1e-12
        %v1806 = vadd.f32 %v1790, 1e-12
        %v1807 = vadd.f32 %v1791, 1e-12
        %v1808 = vadd.f32 %v1792, 1e-12
        %v1809 = vadd.f32 %v1793, 1e-12
        %v1810 = vadd.f32 %v1794, 1e-12
        %v1811 = vadd.f32 %v1795, 1e-12
        %v1812 = vadd.f32 %v1796, 1e-12
        %v1813 = vadd.f32 %v1797, 1e-12
        %v1814 = vadd.f32 %v1798, 1e-12
        %v1815 = vadd.f32 %v1799, 1e-12
        %v1816 = vadd.f32 %v1800, 1e-12
        %v1817 = vadd.f32 %v1801, 1e-12
        %v1818 = vrsqrt.pop %v1802
        %v1819 = vrsqrt.pop %v1803
        %v1820 = vrsqrt.pop %v1804
        %v1821 = vrsqrt.pop %v1805
        %v1822 = vrsqrt.pop %v1806
        %v1823 = vrsqrt.pop %v1807
        %v1824 = vrsqrt.pop %v1808
        %v1825 = vrsqrt.pop %v1809
        %v1826 = vrsqrt.pop %v1810
        %v1827 = vrsqrt.pop %v1811
        %v1828 = vrsqrt.pop %v1812
        %v1829 = vrsqrt.pop %v1813
        %v1830 = vrsqrt.pop %v1814
        %v1831 = vrsqrt.pop %v1815
        %v1832 = vrsqrt.pop %v1816
        %v1833 = vrsqrt.pop %v1817
        %v1834 = vmul.f32 %v1722, %v1818
        %v1835 = vmul.f32 %v1723, %v1819
        %v1836 = vmul.f32 %v1724, %v1820
        %v1837 = vmul.f32 %v1725, %v1821
        %v1838 = vmul.f32 %v1726, %v1822
        %v1839 = vmul.f32 %v1727, %v1823
        %v1840 = vmul.f32 %v1728, %v1824
        %v1841 = vmul.f32 %v1729, %v1825
        %v1842 = vmul.f32 %v1730, %v1826
        %v1843 = vmul.f32 %v1731, %v1827
        %v1844 = vmul.f32 %v1732, %v1828
        %v1845 = vmul.f32 %v1733, %v1829
        %v1846 = vmul.f32 %v1734, %v1830
        %v1847 = vmul.f32 %v1735, %v1831
        %v1848 = vmul.f32 %v1736, %v1832
        %v1849 = vmul.f32 %v1737, %v1833
        %v1850 = vld [vmem:[%s5] sm:$0x1]
        %v1852 = vlaneseq
        %v1853 = vshrl.u32 %v1852, 7
        %v1854 = vsub.s32 0, %v1853
        %v1855 = vrot.slane %v1850, %v1854
        %v1857 = vmul.f32 %v1834, %v1855
        %v1858 = vmul.f32 %v1835, %v1855
        %v1859 = vmul.f32 %v1836, %v1855
        %v1860 = vmul.f32 %v1837, %v1855
        %v1861 = vmul.f32 %v1838, %v1855
        %v1862 = vmul.f32 %v1839, %v1855
        %v1863 = vmul.f32 %v1840, %v1855
        %v1864 = vmul.f32 %v1841, %v1855
        %v1865 = vmul.f32 %v1842, %v1855
        %v1866 = vmul.f32 %v1843, %v1855
        %v1867 = vmul.f32 %v1844, %v1855
        %v1868 = vmul.f32 %v1845, %v1855
        %v1869 = vmul.f32 %v1846, %v1855
        %v1870 = vmul.f32 %v1847, %v1855
        %v1871 = vmul.f32 %v1848, %v1855
        %v1872 = vmul.f32 %v1849, %v1855
        %v1873 = vld [vmem:[%s6] sm:$0x1]
        %v1875 = vlaneseq
        %v1876 = vshrl.u32 %v1875, 7
        %v1877 = vsub.s32 0, %v1876
        %v1878 = vrot.slane %v1873, %v1877
        %v1880 = vadd.f32 %v1857, %v1878
        %v1881 = vadd.f32 %v1858, %v1878
        %v1882 = vadd.f32 %v1859, %v1878
        %v1883 = vadd.f32 %v1860, %v1878
        %v1884 = vadd.f32 %v1861, %v1878
        %v1885 = vadd.f32 %v1862, %v1878
        %v1886 = vadd.f32 %v1863, %v1878
        %v1887 = vadd.f32 %v1864, %v1878
        %v1888 = vadd.f32 %v1865, %v1878
        %v1889 = vadd.f32 %v1866, %v1878
        %v1890 = vadd.f32 %v1867, %v1878
        %v1891 = vadd.f32 %v1868, %v1878
        %v1892 = vadd.f32 %v1869, %v1878
        %v1893 = vadd.f32 %v1870, %v1878
        %v1894 = vadd.f32 %v1871, %v1878
        %v1895 = vadd.f32 %v1872, %v1878
        %1896 = vst [vmem:[%s302] sm:$0xff] %v1880
        %1897 = vst [vmem:[%s302 + $0x8] sm:$0xff] %v1881
        %1898 = vst [vmem:[%s302 + $0x10] sm:$0xff] %v1882
        %1899 = vst [vmem:[%s302 + $0x18] sm:$0xff] %v1883
        %1900 = vst [vmem:[%s302 + $0x20] sm:$0xff] %v1884
        %1901 = vst [vmem:[%s302 + $0x28] sm:$0xff] %v1885
        %1902 = vst [vmem:[%s302 + $0x30] sm:$0xff] %v1886
        %1903 = vst [vmem:[%s302 + $0x38] sm:$0xff] %v1887
        %1904 = vst [vmem:[%s302 + $0x40] sm:$0xff] %v1888
        %1905 = vst [vmem:[%s302 + $0x48] sm:$0xff] %v1889
        %1906 = vst [vmem:[%s302 + $0x50] sm:$0xff] %v1890
        %1907 = vst [vmem:[%s302 + $0x58] sm:$0xff] %v1891
        %1908 = vst [vmem:[%s302 + $0x60] sm:$0xff] %v1892
        %1909 = vst [vmem:[%s302 + $0x68] sm:$0xff] %v1893
        %1910 = vst [vmem:[%s302 + $0x70] sm:$0xff] %v1894
        %1911 = vst [vmem:[%s302 + $0x78] sm:$0xff] %v1895
        %s1912 = sand.u32 %s183, 1
        %s1913 = scalar_lea.sflag [#allocation4], %s1912
        %s1914 = sand.u32 %s183, 1
        %s1915 = smul.addr %s1914, 128
        %s1916 = scalar_lea.vmem [#allocation7], %s1915
        // Predicated region
        $region57: #{tpu_custom_call.1} parent=47 // pred_check
          %p1917 = pneg %p193
        $region58: #{tpu_custom_call.1} parent=47 // pred_check_branch
          %1919 = sbr.rel (%p1917) target = $region60
        $region59: #{tpu_custom_call.1} parent=47 // pred_region
          %s1920 = smul.u32 16, %s23
          %s1922 = ssub.s32 2048, 2048
          %1923 = vsyncadd %s1913, %s1922
          %s1924 = smul.addr %s1920, 128
          %s1925 = scalar_lea.hbm %s7, %s1924
          %s1926 = sshll.u32 %s1916, 4
          %s1927 = int_to_ptr.vmem [resolvable:$true] %s1926
          %1932 = dma.vmem_to_hbm [thread:$0]  %s1927, 2048, %s1925, %s1913, 128, 128, 8
        $region60: #{tpu_custom_call.1} parent=47 // pred_fallthru
          _
      $region48: #{tpu_custom_call.1} parent=5 // pred_fallthru
        _
      %p1933 = scmp.le.s32.totalorder 2, %s18
      // Predicated region
      $region61: #{tpu_custom_call.1} parent=5 // pred_check
        %p1934 = pneg %p1933
      $region62: #{tpu_custom_call.1} parent=5 // pred_check_branch
        %1936 = sbr.rel (%p1934) target = $region64
      $region63: #{tpu_custom_call.1} parent=5 // pred_region
        %s1937 = ssub.s32 %s18, 2
        // Predicated region
        $region65: #{tpu_custom_call.1} parent=63 // pred_check
          %p1938 = pneg %p199
        $region66: #{tpu_custom_call.1} parent=63 // pred_check_branch
          %1940 = sbr.rel (%p1938) target = $region68
        $region67: #{tpu_custom_call.1} parent=63 // pred_region
          %s1941 = sand.u32 %s184, 1
          %s1942 = scalar_lea.sflag [#allocation4], %s1941
          %s1943 = sand.u32 %s184, 1
          %s1944 = smul.addr %s1943, 128
          %s1945 = scalar_lea.vmem [#allocation7], %s1944
          %1946 = dma.done %s1942, 2048
        $region68: #{tpu_custom_call.1} parent=63 // pred_fallthru
          _
      $region64: #{tpu_custom_call.1} parent=5 // pred_fallthru
        _
    $region6: #{tpu_custom_call.1} parent=1 // loop_footer
      %s22 = sadd.s32 1, %s18
    $region7: #{tpu_custom_call.1} parent=1 // loop_footer_branch
      %17 = sbr.rel target = $region3
    $region8: #{tpu_custom_call.1} parent=1 // loop_exit
      _
    %1947 = vsyncpa [#allocation3], 1
    %s1948 = scalar_lea.sflag [#allocation3], 1
    %1949 = vsyncpa %s1948, 1
    %1950 = vsyncpa [#allocation6], 1
    %1951 = vsyncpa [#allocation4], 1
    %s1952 = scalar_lea.sflag [#allocation4], 1
    %1953 = vsyncpa %s1952, 1

</llo_original>
